<compile_context>
chip_gen: v5e
topology: v5e:2x2
jax: 0.10.0
libtpu: 0.0.40
codegen_flags: <defaults>
</compile_context>

<pallas_src>
import jax
import jax.numpy as jnp
from jax.experimental import pallas as pl
from jax.experimental.pallas import tpu as pltpu

_EPS = 1e-5


# ----------------------------------------------------------------------------
# Fused generator kernel
# ----------------------------------------------------------------------------
def _make_generator_kernel(num_blocks, inv_batch):
    """Fused forward kernel.

    Ref order:
      inputs, labels, w_in', w_lab', b',
      [p_0, p_0^T, m_1], [p_1, p_1^T, m_2], ...,
      out

    where the k-th block is: BatchNorm2d (train-mode batch stats, gamma=1,
    beta=0) + ReLU followed by the (k+1)-th ConvTranspose2d as one matmul.
    The first ConvTranspose2d is already folded into w_in'/w_lab'/b'.
    """

    def kernel(*refs):
        f32 = jnp.float32
        x_ref, lab_ref, w_in_ref, w_lab_ref, b_ref = refs[:5]
        o_ref = refs[-1]
        blk = refs[5:-1]

        # Folded Linear + first ConvTranspose2d:
        #   cat([x, lab], 1) @ W^T @ M_0 + b @ M_0
        h = (jnp.dot(x_ref[...], w_in_ref[...], preferred_element_type=f32)
             + jnp.dot(lab_ref[...], w_lab_ref[...], preferred_element_type=f32)
             + b_ref[...])

        for i in range(num_blocks):
            p_ref = blk[3 * i]          # (C*S, C), scaled by 1/S, f32
            pt_ref = blk[3 * i + 1]     # (C, C*S), f32
            m_ref = blk[3 * i + 2]      # (Cin*S, Cout*S'), bf16

            # --- BatchNorm2d (train-mode biased batch stats) + ReLU --------
            # One batched gather dot: rows are [sum; sumsq] -> [mean; E[x^2]]
            # (1/S is baked into P at prepare time; 1/B applied here).  Stats
            # stay in f32 end to end.
            stats = jnp.concatenate(
                [jnp.sum(h, axis=0, keepdims=True),
                 jnp.sum(h * h, axis=0, keepdims=True)], axis=0)       # (2, C*S)
            st = jnp.dot(stats, p_ref[...],
                         preferred_element_type=f32) * inv_batch       # (2, C)
            mean = st[0:1]                                             # (1, C)
            var = jnp.maximum(st[1:2] - mean * mean, 0.0)
            inv_std = jax.lax.rsqrt(var + _EPS)                        # (1, C)
            # One batched broadcast dot: rows are [scale; shift].
            sc = jnp.concatenate([inv_std, -mean * inv_std], axis=0)   # (2, C)
            cols = jnp.dot(sc, pt_ref[...],
                           preferred_element_type=f32)                 # (2, C*S)
            h = jnp.maximum(h * cols[0:1] + cols[1:2], 0.0)            # FMA + ReLU

            # --- ConvTranspose2d as ONE bf16 MXU matmul (f32 accumulate) ---
            h = jnp.dot(h.astype(jnp.bfloat16), m_ref[...],
                        preferred_element_type=f32)

        # Final Tanh followed by (x + 1) / 2.
        o_ref[...] = (jnp.tanh(h) + 1.0) * 0.5

    return kernel


# ----------------------------------------------------------------------------
# One-time weight preprocessing (pure layout plumbing, done at prepare time)
# ----------------------------------------------------------------------------
def _deconv_as_matrix(w_pt, h_in, w_in, stride, padding):
    """Dense matrix of ConvTranspose2d(bias=False) on NCHW-flattened vectors.

    w_pt: (Cin, Cout, K, K) PyTorch ConvTranspose2d weight.
    Returns M with out_flat = in_flat @ M (flattening order (C, H, W)),
    plus the output spatial size (Ho, Wo).
    """
    _, _, K, _ = w_pt.shape
    cin, cout = w_pt.shape[0], w_pt.shape[1]
    h_out = (h_in - 1) * stride - 2 * padding + K
    w_out = (w_in - 1) * stride - 2 * padding + K

    iy = jnp.arange(h_in)[:, None]
    oy = jnp.arange(h_out)[None, :]
    ky = oy + padding - stride * iy                       # (H, Ho)
    my = (ky >= 0) & (ky < K)
    ix = jnp.arange(w_in)[:, None]
    ox = jnp.arange(w_out)[None, :]
    kx = ox + padding - stride * ix                       # (W, Wo)
    mx = (kx >= 0) & (kx < K)

    g = w_pt[:, :, jnp.clip(ky, 0, K - 1)[:, :, None, None],
             jnp.clip(kx, 0, K - 1)[None, None, :, :]]    # (Cin,Cout,H,Ho,W,Wo)
    mask = (my[:, :, None, None] & mx[None, None, :, :]).astype(w_pt.dtype)
    g = g * mask[None, None]
    m = jnp.transpose(g, (0, 2, 4, 1, 3, 5)).reshape(cin * h_in * w_in,
                                                     cout * h_out * w_out)
    return m, h_out, w_out


def init_params(key, input_dim, class_dim, filter_nums, kernel_size):
    """PyTorch-convention parameter shapes (Linear: (out,in); ConvT: (Cin,Cout,K,K))."""
    keys = jax.random.split(key, 2 * len(filter_nums))
    din = input_dim + class_dim
    params = {
        "lin_w": 0.05 * jax.random.normal(keys[0], (filter_nums[0], din),
                                          jnp.float32),
        "lin_b": 0.05 * jax.random.normal(keys[1], (filter_nums[0],),
                                          jnp.float32),
        "deconv": [],
    }
    for i in range(1, len(filter_nums)):
        w = 0.05 * jax.random.normal(
            keys[2 * i],
            (filter_nums[i - 1], filter_nums[i], kernel_size, kernel_size),
            jnp.float32)
        params["deconv"].append(w)
    return params


def prepare_params(params, input_dim, class_dim, filter_nums, strides,
                   kernel_size):
    """Convert PyTorch-layout weights into matmul-ready form ONCE (not per call)."""
    del class_dim, kernel_size  # implied by the stored weight shapes
    n = len(filter_nums)

    # Per-layer dense deconv matrices + output spatial sizes.
    mats = []
    h = w = 1
    for i in range(1, n):
        stride = strides[i - 1]
        padding = 0 if stride == 1 else 1
        m, h, w = _deconv_as_matrix(params["deconv"][i - 1], h, w, stride,
                                    padding)
        mats.append((m, h, w))

    # Fold Linear + first deconv: (cat(x,lab) @ W^T + b) @ M_0.
    m0, h0, w0 = mats[0]
    w_full = jnp.dot(jnp.transpose(params["lin_w"]), m0)   # (din, C1*H1*W1)
    w_in = w_full[:input_dim]                              # (input_dim, C1*S1)
    w_lab = w_full[input_dim:]                             # (class_dim, C1*S1)
    b = jnp.dot(params["lin_b"][None, :], m0)              # (1, C1*S1)

    # BN indicator matrices (kept f32 -- stats precision); 1/S baked into P.
    #   P[c*S+s, c'] = (1/S) * [c'==c]   gathers per-channel sums,
    #   P^T[c, c*S+s] = [c'==c]          broadcasts per-channel scale/shift.
    bn_ps = []
    spatial = [h0 * w0] + [hh * ww for (_, hh, ww) in mats[1:]]
    for idx in range(1, n - 1):
        c = filter_nums[idx]
        s = spatial[idx - 1]
        p = jnp.repeat(jnp.eye(c, dtype=jnp.float32), s, axis=0) * (1.0 / s)
        pt = jnp.repeat(jnp.eye(c, dtype=jnp.float32), s, axis=1)
        bn_ps.append((p, pt))

    # Remaining deconv matrices stored in bf16: halves the dominant per-call
    # HBM->VMEM weight DMA; MXU is natively bf16 on v5e/v6e/v7x.
    # TODO(synk): optional sub-pixel phase decomposition of the stride-2
    # matrices would drop ~75% structural zeros; skipped (not worth the
    # permutation plumbing at this size).
    big_mats = [m.astype(jnp.bfloat16) for (m, _, _) in mats[1:]]

    h_out, w_out = mats[-1][1], mats[-1][2]
    out_cols = mats[-1][0].shape[1]

    return {
        "w_in": w_in, "w_lab": w_lab, "b": b,
        "mats": big_mats, "bn_ps": bn_ps,
        "out_c": filter_nums[-1], "out_hw": (h_out, w_out),
        "out_cols": out_cols,
    }


# ----------------------------------------------------------------------------
# Forward: ONE gridless pallas_call (~0.6 MiB resident VMEM weights)
# ----------------------------------------------------------------------------
def generator_forward(prepared, inputs, labels):
    # NOTE: BatchNorm uses train-mode biased batch statistics (gamma=1,
    # beta=0, eps=1e-5) -- the state of a freshly constructed nn.Module in
    # train().  If the batch were padded, padded rows would need masking.
    batch = inputs.shape[0]
    bn_ps = prepared["bn_ps"]
    mats = prepared["mats"]
    num_blocks = len(mats)
    assert num_blocks == len(bn_ps)

    operands = [inputs, labels, prepared["w_in"], prepared["w_lab"],
                prepared["b"]]
    for i in range(num_blocks):
        p, pt = bn_ps[i]
        operands.extend([p, pt, mats[i]])

    vmem = pl.BlockSpec(memory_space=pltpu.MemorySpace.VMEM)
    flat = pl.pallas_call(
        _make_generator_kernel(num_blocks, 1.0 / float(batch)),
        out_shape=jax.ShapeDtypeStruct((batch, prepared["out_cols"]),
                                       jnp.float32),
        in_specs=[vmem] * len(operands),
        out_specs=vmem,
    )(*operands)

    h, w = prepared["out_hw"]
    # (C, H, W)-ordered flattening -> metadata-only reshape to NCHW.
    return flat.reshape(batch, prepared["out_c"], h, w)


if __name__ == "__main__":
    # Small config consistent with the module: 1x1 -> 4x4 -> 8x8 -> 16x16
    input_dim = 16
    class_dim = 8
    filter_nums = [32, 16, 8, 1]
    strides = [1, 2, 2]
    kernel_size = 4
    batch = 2

    key = jax.random.PRNGKey(0)
    k_in, k_lab, k_par = jax.random.split(key, 3)
    inputs = jax.random.normal(k_in, (batch, input_dim), jnp.float32)
    labels = jax.random.normal(k_lab, (batch, class_dim), jnp.float32)

    params = init_params(k_par, input_dim, class_dim, filter_nums, kernel_size)
    prepared = prepare_params(params, input_dim, class_dim, filter_nums,
                              strides, kernel_size)

    out = generator_forward(prepared, inputs, labels)
    out = jax.block_until_ready(out)
    assert out.shape == (batch, filter_nums[-1], 16, 16), out.shape
    assert bool(jnp.all(jnp.isfinite(out)))
    print("KERNEL_OK")
</pallas_src>

<mosaic_0001>
module attributes {stable_mosaic.version = 11 : i64} {
  func.func @kernel(%arg0: memref<2x16xf32, #tpu.memory_space<vmem>>, %arg1: memref<2x8xf32, #tpu.memory_space<vmem>>, %arg2: memref<16x256xf32, #tpu.memory_space<vmem>>, %arg3: memref<8x256xf32, #tpu.memory_space<vmem>>, %arg4: memref<1x256xf32, #tpu.memory_space<vmem>>, %arg5: memref<256x16xf32, #tpu.memory_space<vmem>>, %arg6: memref<16x256xf32, #tpu.memory_space<vmem>>, %arg7: memref<256x512xbf16, #tpu.memory_space<vmem>>, %arg8: memref<512x8xf32, #tpu.memory_space<vmem>>, %arg9: memref<8x512xf32, #tpu.memory_space<vmem>>, %arg10: memref<512x256xbf16, #tpu.memory_space<vmem>>, %arg11: memref<2x256xf32, #tpu.memory_space<vmem>>) attributes {dimension_semantics = [], scalar_prefetch = 0 : i64, scratch_operands = 0 : i64, tpu.core_type = #tpu.core_type<tc>} {
    %c0 = arith.constant 0 : index
    %c0_0 = arith.constant 0 : index
    %0 = vector.load %arg0[%c0, %c0_0] : memref<2x16xf32, #tpu.memory_space<vmem>>, vector<2x16xf32>
    %c0_1 = arith.constant 0 : index
    %c0_2 = arith.constant 0 : index
    %1 = vector.load %arg2[%c0_1, %c0_2] : memref<16x256xf32, #tpu.memory_space<vmem>>, vector<16x256xf32>
    %cst = arith.constant dense<0.000000e+00> : vector<2x256xf32>
    %2 = tpu.matmul %0, %1, %cst {dimension_numbers = #tpu.dot_dimension_numbers<[1], [0], [0], [1], [0, 0, 1, 1], [], []>} : vector<2x16xf32>, vector<16x256xf32>, vector<2x256xf32> -> vector<2x256xf32>
    %c0_3 = arith.constant 0 : index
    %c0_4 = arith.constant 0 : index
    %3 = vector.load %arg1[%c0_3, %c0_4] : memref<2x8xf32, #tpu.memory_space<vmem>>, vector<2x8xf32>
    %c0_5 = arith.constant 0 : index
    %c0_6 = arith.constant 0 : index
    %4 = vector.load %arg3[%c0_5, %c0_6] : memref<8x256xf32, #tpu.memory_space<vmem>>, vector<8x256xf32>
    %cst_7 = arith.constant dense<0.000000e+00> : vector<2x256xf32>
    %5 = tpu.matmul %3, %4, %cst_7 {dimension_numbers = #tpu.dot_dimension_numbers<[1], [0], [0], [1], [0, 0, 1, 1], [], []>} : vector<2x8xf32>, vector<8x256xf32>, vector<2x256xf32> -> vector<2x256xf32>
    %6 = arith.addf %2, %5 : vector<2x256xf32>
    %c0_8 = arith.constant 0 : index
    %c0_9 = arith.constant 0 : index
    %7 = vector.load %arg4[%c0_8, %c0_9] : memref<1x256xf32, #tpu.memory_space<vmem>>, vector<1x256xf32>
    %8 = vector.broadcast %7 : vector<1x256xf32> to vector<2x256xf32>
    %9 = arith.addf %6, %8 : vector<2x256xf32>
    %cst_10 = arith.constant dense<0.000000e+00> : vector<256xf32>
    %10 = vector.multi_reduction <add>, %9, %cst_10 [0] : vector<2x256xf32> to vector<256xf32>
    %11 = vector.shape_cast %10 : vector<256xf32> to vector<1x256xf32>
    %12 = arith.mulf %9, %9 : vector<2x256xf32>
    %cst_11 = arith.constant dense<0.000000e+00> : vector<256xf32>
    %13 = vector.multi_reduction <add>, %12, %cst_11 [0] : vector<2x256xf32> to vector<256xf32>
    %14 = vector.shape_cast %13 : vector<256xf32> to vector<1x256xf32>
    %15 = tpu.concatenate %11, %14 in 0 : vector<1x256xf32>, vector<1x256xf32> -> vector<2x256xf32>
    %c0_12 = arith.constant 0 : index
    %c0_13 = arith.constant 0 : index
    %16 = vector.load %arg5[%c0_12, %c0_13] : memref<256x16xf32, #tpu.memory_space<vmem>>, vector<256x16xf32>
    %cst_14 = arith.constant dense<0.000000e+00> : vector<2x16xf32>
    %17 = tpu.matmul %15, %16, %cst_14 {dimension_numbers = #tpu.dot_dimension_numbers<[1], [0], [0], [1], [0, 0, 1, 1], [], []>} : vector<2x256xf32>, vector<256x16xf32>, vector<2x16xf32> -> vector<2x16xf32>
    %cst_15 = arith.constant 5.000000e-01 : f32
    %18 = vector.broadcast %cst_15 : f32 to vector<2x16xf32>
    %19 = arith.mulf %17, %18 : vector<2x16xf32>
    %20 = vector.extract_strided_slice %19 {offsets = [0, 0], sizes = [1, 16], strides = [1, 1]} : vector<2x16xf32> to vector<1x16xf32>
    %21 = vector.extract_strided_slice %19 {offsets = [1, 0], sizes = [1, 16], strides = [1, 1]} : vector<2x16xf32> to vector<1x16xf32>
    %22 = arith.mulf %20, %20 : vector<1x16xf32>
    %23 = arith.subf %21, %22 : vector<1x16xf32>
    %cst_16 = arith.constant 0.000000e+00 : f32
    %24 = vector.broadcast %cst_16 : f32 to vector<1x16xf32>
    %25 = arith.maximumf %23, %24 : vector<1x16xf32>
    %cst_17 = arith.constant 9.99999974E-6 : f32
    %26 = vector.broadcast %cst_17 : f32 to vector<1x16xf32>
    %27 = arith.addf %25, %26 : vector<1x16xf32>
    %28 = math.rsqrt %27 : vector<1x16xf32>
    %cst_18 = arith.constant 0.000000e+00 : f32
    %29 = vector.broadcast %cst_18 : f32 to vector<1x16xf32>
    %30 = arith.subf %29, %20 : vector<1x16xf32>
    %31 = arith.mulf %30, %28 : vector<1x16xf32>
    %32 = tpu.concatenate %28, %31 in 0 : vector<1x16xf32>, vector<1x16xf32> -> vector<2x16xf32>
    %c0_19 = arith.constant 0 : index
    %c0_20 = arith.constant 0 : index
    %33 = vector.load %arg6[%c0_19, %c0_20] : memref<16x256xf32, #tpu.memory_space<vmem>>, vector<16x256xf32>
    %cst_21 = arith.constant dense<0.000000e+00> : vector<2x256xf32>
    %34 = tpu.matmul %32, %33, %cst_21 {dimension_numbers = #tpu.dot_dimension_numbers<[1], [0], [0], [1], [0, 0, 1, 1], [], []>} : vector<2x16xf32>, vector<16x256xf32>, vector<2x256xf32> -> vector<2x256xf32>
    %35 = vector.extract_strided_slice %34 {offsets = [0, 0], sizes = [1, 256], strides = [1, 1]} : vector<2x256xf32> to vector<1x256xf32>
    %36 = vector.broadcast %35 : vector<1x256xf32> to vector<2x256xf32>
    %37 = arith.mulf %9, %36 : vector<2x256xf32>
    %38 = vector.extract_strided_slice %34 {offsets = [1, 0], sizes = [1, 256], strides = [1, 1]} : vector<2x256xf32> to vector<1x256xf32>
    %39 = vector.broadcast %38 : vector<1x256xf32> to vector<2x256xf32>
    %40 = arith.addf %37, %39 : vector<2x256xf32>
    %cst_22 = arith.constant 0.000000e+00 : f32
    %41 = vector.broadcast %cst_22 : f32 to vector<2x256xf32>
    %42 = arith.maximumf %40, %41 : vector<2x256xf32>
    %43 = arith.truncf %42 : vector<2x256xf32> to vector<2x256xbf16>
    %c0_23 = arith.constant 0 : index
    %c0_24 = arith.constant 0 : index
    %44 = vector.load %arg7[%c0_23, %c0_24] : memref<256x512xbf16, #tpu.memory_space<vmem>>, vector<256x512xbf16>
    %cst_25 = arith.constant dense<0.000000e+00> : vector<2x512xf32>
    %45 = tpu.matmul %43, %44, %cst_25 {dimension_numbers = #tpu.dot_dimension_numbers<[1], [0], [0], [1], [0, 0, 1, 1], [], []>} : vector<2x256xbf16>, vector<256x512xbf16>, vector<2x512xf32> -> vector<2x512xf32>
    %cst_26 = arith.constant dense<0.000000e+00> : vector<512xf32>
    %46 = vector.multi_reduction <add>, %45, %cst_26 [0] : vector<2x512xf32> to vector<512xf32>
    %47 = vector.shape_cast %46 : vector<512xf32> to vector<1x512xf32>
    %48 = arith.mulf %45, %45 : vector<2x512xf32>
    %cst_27 = arith.constant dense<0.000000e+00> : vector<512xf32>
    %49 = vector.multi_reduction <add>, %48, %cst_27 [0] : vector<2x512xf32> to vector<512xf32>
    %50 = vector.shape_cast %49 : vector<512xf32> to vector<1x512xf32>
    %51 = tpu.concatenate %47, %50 in 0 : vector<1x512xf32>, vector<1x512xf32> -> vector<2x512xf32>
    %c0_28 = arith.constant 0 : index
    %c0_29 = arith.constant 0 : index
    %52 = vector.load %arg8[%c0_28, %c0_29] : memref<512x8xf32, #tpu.memory_space<vmem>>, vector<512x8xf32>
    %cst_30 = arith.constant dense<0.000000e+00> : vector<2x8xf32>
    %53 = tpu.matmul %51, %52, %cst_30 {dimension_numbers = #tpu.dot_dimension_numbers<[1], [0], [0], [1], [0, 0, 1, 1], [], []>} : vector<2x512xf32>, vector<512x8xf32>, vector<2x8xf32> -> vector<2x8xf32>
    %cst_31 = arith.constant 5.000000e-01 : f32
    %54 = vector.broadcast %cst_31 : f32 to vector<2x8xf32>
    %55 = arith.mulf %53, %54 : vector<2x8xf32>
    %56 = vector.extract_strided_slice %55 {offsets = [0, 0], sizes = [1, 8], strides = [1, 1]} : vector<2x8xf32> to vector<1x8xf32>
    %57 = vector.extract_strided_slice %55 {offsets = [1, 0], sizes = [1, 8], strides = [1, 1]} : vector<2x8xf32> to vector<1x8xf32>
    %58 = arith.mulf %56, %56 : vector<1x8xf32>
    %59 = arith.subf %57, %58 : vector<1x8xf32>
    %cst_32 = arith.constant 0.000000e+00 : f32
    %60 = vector.broadcast %cst_32 : f32 to vector<1x8xf32>
    %61 = arith.maximumf %59, %60 : vector<1x8xf32>
    %cst_33 = arith.constant 9.99999974E-6 : f32
    %62 = vector.broadcast %cst_33 : f32 to vector<1x8xf32>
    %63 = arith.addf %61, %62 : vector<1x8xf32>
    %64 = math.rsqrt %63 : vector<1x8xf32>
    %cst_34 = arith.constant 0.000000e+00 : f32
    %65 = vector.broadcast %cst_34 : f32 to vector<1x8xf32>
    %66 = arith.subf %65, %56 : vector<1x8xf32>
    %67 = arith.mulf %66, %64 : vector<1x8xf32>
    %68 = tpu.concatenate %64, %67 in 0 : vector<1x8xf32>, vector<1x8xf32> -> vector<2x8xf32>
    %c0_35 = arith.constant 0 : index
    %c0_36 = arith.constant 0 : index
    %69 = vector.load %arg9[%c0_35, %c0_36] : memref<8x512xf32, #tpu.memory_space<vmem>>, vector<8x512xf32>
    %cst_37 = arith.constant dense<0.000000e+00> : vector<2x512xf32>
    %70 = tpu.matmul %68, %69, %cst_37 {dimension_numbers = #tpu.dot_dimension_numbers<[1], [0], [0], [1], [0, 0, 1, 1], [], []>} : vector<2x8xf32>, vector<8x512xf32>, vector<2x512xf32> -> vector<2x512xf32>
    %71 = vector.extract_strided_slice %70 {offsets = [0, 0], sizes = [1, 512], strides = [1, 1]} : vector<2x512xf32> to vector<1x512xf32>
    %72 = vector.broadcast %71 : vector<1x512xf32> to vector<2x512xf32>
    %73 = arith.mulf %45, %72 : vector<2x512xf32>
    %74 = vector.extract_strided_slice %70 {offsets = [1, 0], sizes = [1, 512], strides = [1, 1]} : vector<2x512xf32> to vector<1x512xf32>
    %75 = vector.broadcast %74 : vector<1x512xf32> to vector<2x512xf32>
    %76 = arith.addf %73, %75 : vector<2x512xf32>
    %cst_38 = arith.constant 0.000000e+00 : f32
    %77 = vector.broadcast %cst_38 : f32 to vector<2x512xf32>
    %78 = arith.maximumf %76, %77 : vector<2x512xf32>
    %79 = arith.truncf %78 : vector<2x512xf32> to vector<2x512xbf16>
    %c0_39 = arith.constant 0 : index
    %c0_40 = arith.constant 0 : index
    %80 = vector.load %arg10[%c0_39, %c0_40] : memref<512x256xbf16, #tpu.memory_space<vmem>>, vector<512x256xbf16>
    %cst_41 = arith.constant dense<0.000000e+00> : vector<2x256xf32>
    %81 = tpu.matmul %79, %80, %cst_41 {dimension_numbers = #tpu.dot_dimension_numbers<[1], [0], [0], [1], [0, 0, 1, 1], [], []>} : vector<2x512xbf16>, vector<512x256xbf16>, vector<2x256xf32> -> vector<2x256xf32>
    %82 = math.tanh %81 : vector<2x256xf32>
    %cst_42 = arith.constant 1.000000e+00 : f32
    %83 = vector.broadcast %cst_42 : f32 to vector<2x256xf32>
    %84 = arith.addf %82, %83 : vector<2x256xf32>
    %cst_43 = arith.constant 5.000000e-01 : f32
    %85 = vector.broadcast %cst_43 : f32 to vector<2x256xf32>
    %86 = arith.mulf %84, %85 : vector<2x256xf32>
    %c0_44 = arith.constant 0 : index
    %c0_45 = arith.constant 0 : index
    %87 = vector.load %arg11[%c0_44, %c0_45] : memref<2x256xf32, #tpu.memory_space<vmem>>, vector<2x256xf32>
    tpu.vector_store %arg11[%c0_44, %c0_45], %86 {strides = array<i32>} : memref<2x256xf32, #tpu.memory_space<vmem>>, vector<2x256xf32>,
    return
  }
}

</mosaic_0001>

<llo_original>
// kernel: tpu_custom_call.1
$region0: #{tpu_custom_call.1}
  #allocation0 [shape = 'u32[]', space=smem, size = 0x4, offset = 0x4, fixed_abs, tag = 'smem constant byte address 0x4 - core index']
  #allocation1 [shape = 'u32[72,128]{1,0:T(1,128)}', space=vmem, size = 0x9000, scoped, tag = 'internal scratch']
  %s0 = inlined_call_operand.vmem [shape: f32[2,16], index: 0, kind: input, shape index: {}]
  %s1 = inlined_call_operand.vmem [shape: f32[2,8], index: 1, kind: input, shape index: {}]
  %s2 = inlined_call_operand.vmem [shape: f32[16,256], index: 2, kind: input, shape index: {}]
  %s3 = inlined_call_operand.vmem [shape: f32[8,256], index: 3, kind: input, shape index: {}]
  %s4 = inlined_call_operand.vmem [shape: f32[1,256], index: 4, kind: input, shape index: {}]
  %s5 = inlined_call_operand.vmem [shape: f32[256,16], index: 5, kind: input, shape index: {}]
  %s6 = inlined_call_operand.vmem [shape: f32[16,256], index: 6, kind: input, shape index: {}]
  %s7 = inlined_call_operand.vmem [shape: bf16[256,512], index: 7, kind: input, shape index: {}]
  %s8 = inlined_call_operand.vmem [shape: f32[512,8], index: 8, kind: input, shape index: {}]
  %s9 = inlined_call_operand.vmem [shape: f32[8,512], index: 9, kind: input, shape index: {}]
  %s10 = inlined_call_operand.hbm [shape: bf16[512,256], index: 10, kind: input, shape index: {}]
  %s11 = inlined_call_operand.hbm [shape: f32[2,256], index: 11, kind: output, shape index: {}]
  %s12 = sld [smem:[#allocation0]]
  $region58: #{tpu_custom_call.1} parent=0
    _
  %s14 = ssub.s32 1, %s12
  %s15 = scalar_select 0, %s14, %s12
  $region1: #{tpu_custom_call.1} parent=0
    #allocation2 [shape = 'u8[262144]{0}', space=vmem, size = 0x40000, scoped, tag = 'input window, operand 10, single buffered']
    #allocation3 [shape = 's32[1]{0}', space=sflag, size = 0x4, scoped, tag = 'scoped memory for tpu_custom_call.1']
    #allocation4 [shape = 's32[1]{0}', space=sflag, size = 0x4, scoped, tag = 'scoped memory for tpu_custom_call.1']
    #allocation5 [shape = 'u8[2048]{0}', space=vmem, size = 0x800, scoped, tag = 'output window, operand 0, single buffered']
    %16 = vsyncpa [#allocation3], 0
    %17 = vsyncpa [#allocation4], 0
    // Predicated region
    $region2: #{tpu_custom_call.1} parent=1 // pred_check
      _
    $region3: #{tpu_custom_call.1} parent=1 // pred_check_branch
      %19 = sbr.rel (0) target = $region5
    $region4: #{tpu_custom_call.1} parent=1 // pred_region
      _
    $region5: #{tpu_custom_call.1} parent=1 // pred_fallthru
      _
    // Predicated region
    $region6: #{tpu_custom_call.1} parent=1 // pred_check
      _
    $region7: #{tpu_custom_call.1} parent=1 // pred_check_branch
      %21 = sbr.rel (0) target = $region9
    $region8: #{tpu_custom_call.1} parent=1 // pred_region
      _
    $region9: #{tpu_custom_call.1} parent=1 // pred_fallthru
      _
    // Predicated region
    $region10: #{tpu_custom_call.1} parent=1 // pred_check
      _
    $region11: #{tpu_custom_call.1} parent=1 // pred_check_branch
      %23 = sbr.rel (0) target = $region13
    $region12: #{tpu_custom_call.1} parent=1 // pred_region
      _
    $region13: #{tpu_custom_call.1} parent=1 // pred_fallthru
      _
    // Predicated region
    $region14: #{tpu_custom_call.1} parent=1 // pred_check
      _
    $region15: #{tpu_custom_call.1} parent=1 // pred_check_branch
      %25 = sbr.rel (0) target = $region17
    $region16: #{tpu_custom_call.1} parent=1 // pred_region
      _
    $region17: #{tpu_custom_call.1} parent=1 // pred_fallthru
      _
    // Predicated region
    $region18: #{tpu_custom_call.1} parent=1 // pred_check
      _
    $region19: #{tpu_custom_call.1} parent=1 // pred_check_branch
      %27 = sbr.rel (0) target = $region21
    $region20: #{tpu_custom_call.1} parent=1 // pred_region
      _
    $region21: #{tpu_custom_call.1} parent=1 // pred_fallthru
      _
    // Predicated region
    $region22: #{tpu_custom_call.1} parent=1 // pred_check
      _
    $region23: #{tpu_custom_call.1} parent=1 // pred_check_branch
      %29 = sbr.rel (0) target = $region25
    $region24: #{tpu_custom_call.1} parent=1 // pred_region
      _
    $region25: #{tpu_custom_call.1} parent=1 // pred_fallthru
      _
    // Predicated region
    $region26: #{tpu_custom_call.1} parent=1 // pred_check
      _
    $region27: #{tpu_custom_call.1} parent=1 // pred_check_branch
      %31 = sbr.rel (0) target = $region29
    $region28: #{tpu_custom_call.1} parent=1 // pred_region
      _
    $region29: #{tpu_custom_call.1} parent=1 // pred_fallthru
      _
    // Predicated region
    $region30: #{tpu_custom_call.1} parent=1 // pred_check
      _
    $region31: #{tpu_custom_call.1} parent=1 // pred_check_branch
      %33 = sbr.rel (0) target = $region33
    $region32: #{tpu_custom_call.1} parent=1 // pred_region
      _
    $region33: #{tpu_custom_call.1} parent=1 // pred_fallthru
      _
    // Predicated region
    $region34: #{tpu_custom_call.1} parent=1 // pred_check
      _
    $region35: #{tpu_custom_call.1} parent=1 // pred_check_branch
      %35 = sbr.rel (0) target = $region37
    $region36: #{tpu_custom_call.1} parent=1 // pred_region
      _
    $region37: #{tpu_custom_call.1} parent=1 // pred_fallthru
      _
    // Predicated region
    $region38: #{tpu_custom_call.1} parent=1 // pred_check
      _
    $region39: #{tpu_custom_call.1} parent=1 // pred_check_branch
      %37 = sbr.rel (0) target = $region41
    $region40: #{tpu_custom_call.1} parent=1 // pred_region
      _
    $region41: #{tpu_custom_call.1} parent=1 // pred_fallthru
      _
    // Predicated region
    $region42: #{tpu_custom_call.1} parent=1 // pred_check
      _
    $region43: #{tpu_custom_call.1} parent=1 // pred_check_branch
      %39 = sbr.rel (0) target = $region45
    $region44: #{tpu_custom_call.1} parent=1 // pred_region
      %41 = vsyncadd [#allocation3], 0
      %s42 = sshll.u32 %s10, 4
      %s43 = int_to_ptr.hbm [resolvable:$true] %s42
      %s44 = sshll.u32 [#allocation2], 4
      %s45 = int_to_ptr.vmem [resolvable:$true] %s44
      %50 = dma.hbm_to_vmem [thread:$0]  %s43, 8192, %s45, [#allocation3], 128, 128, 8
    $region45: #{tpu_custom_call.1} parent=1 // pred_fallthru
      _
    // Predicated region
    $region46: #{tpu_custom_call.1} parent=1 // pred_check
      _
    $region47: #{tpu_custom_call.1} parent=1 // pred_check_branch
      %52 = sbr.rel (0) target = $region49
    $region48: #{tpu_custom_call.1} parent=1 // pred_region
      %54 = dma.done [#allocation3], 8192
    $region49: #{tpu_custom_call.1} parent=1 // pred_fallthru
      _
    %v55 = vld [vmem:[%s0] sm:$0x3]
    %v56 = vld [vmem:[%s2] sm:$0xff]
    %v57 = vld [vmem:[%s2 + $0x8] sm:$0xff]
    %v58 = vld [vmem:[%s2 + $0x10] sm:$0xff]
    %v59 = vld [vmem:[%s2 + $0x18] sm:$0xff]
    %v60 = vld [vmem:[%s1] sm:$0x3]
    %v61 = vld [vmem:[%s3] sm:$0xff]
    %v62 = vld [vmem:[%s3 + $0x8] sm:$0xff]
    %vm63 = vcmask 64512
    %v65 = vsel %vm63, %v60, 0
    %67 = vmatpush.msra.mxu0 0.0
    %68 = vmatpush.msra.mxu0 0.0
    %69 = vmatpush.msra.mxu0 0.0
    %70 = vmatpush.msra.mxu0 0.0
    %71 = vmatpush.msra.mxu0 0.0
    %72 = vmatpush.msra.mxu0 0.0
    %73 = vmatpush.msra.mxu0 0.0
    %74 = vmatpush.msra.mxu0 0.0
    %75 = vmatpush.msra.mxu0 0.0
    %76 = vmatpush.msra.mxu0 0.0
    %77 = vmatpush.msra.mxu0 0.0
    %78 = vmatpush.msra.mxu0 0.0
    %79 = vmatpush.msra.mxu0 0.0
    %80 = vmatpush.msra.mxu0 0.0
    %81 = vmatpush.msra.mxu0 0.0
    %82 = vmatpush.msra.mxu0 %v61
    %83 = vmatmul.f32.gmra.mxu0 %v65
    %v84 = vpop.f32.mrf.mxu0
    %v85 = vadd.f32 0.0, %v84
    %86 = vdwg.mxu0
    %87 = vmatpush.msra.mxu0 0.0
    %88 = vmatpush.msra.mxu0 0.0
    %89 = vmatpush.msra.mxu0 0.0
    %90 = vmatpush.msra.mxu0 0.0
    %91 = vmatpush.msra.mxu0 0.0
    %92 = vmatpush.msra.mxu0 0.0
    %93 = vmatpush.msra.mxu0 0.0
    %94 = vmatpush.msra.mxu0 0.0
    %95 = vmatpush.msra.mxu0 0.0
    %96 = vmatpush.msra.mxu0 0.0
    %97 = vmatpush.msra.mxu0 0.0
    %98 = vmatpush.msra.mxu0 0.0
    %99 = vmatpush.msra.mxu0 0.0
    %100 = vmatpush.msra.mxu0 0.0
    %101 = vmatpush.msra.mxu0 0.0
    %102 = vmatpush.msra.mxu0 %v62
    %103 = vmatmul.f32.gmra.mxu0 %v65
    %v104 = vpop.f32.mrf.mxu0
    %v105 = vadd.f32 0.0, %v104
    %106 = vdwg.mxu0
    %vm107 = vcmask 130048
    %v109 = vsel %vm107, %v55, 0
    %111 = vmatpush.msra.mxu0 0.0
    %112 = vmatpush.msra.mxu0 0.0
    %113 = vmatpush.msra.mxu0 0.0
    %114 = vmatpush.msra.mxu0 0.0
    %115 = vmatpush.msra.mxu0 0.0
    %116 = vmatpush.msra.mxu0 0.0
    %117 = vmatpush.msra.mxu0 0.0
    %118 = vmatpush.msra.mxu0 0.0
    %119 = vmatpush.msra.mxu0 0.0
    %120 = vmatpush.msra.mxu0 0.0
    %121 = vmatpush.msra.mxu0 0.0
    %122 = vmatpush.msra.mxu0 0.0
    %123 = vmatpush.msra.mxu0 0.0
    %124 = vmatpush.msra.mxu0 0.0
    %125 = vmatpush.msra.mxu0 %v58
    %126 = vmatpush.msra.mxu0 %v56
    %127 = vmatmul.f32.gmra.mxu0 %v109
    %v128 = vpop.f32.mrf.mxu0
    %v129 = vadd.f32 %v85, %v128
    %130 = vdwg.mxu0
    %131 = vmatpush.msra.mxu0 0.0
    %132 = vmatpush.msra.mxu0 0.0
    %133 = vmatpush.msra.mxu0 0.0
    %134 = vmatpush.msra.mxu0 0.0
    %135 = vmatpush.msra.mxu0 0.0
    %136 = vmatpush.msra.mxu0 0.0
    %137 = vmatpush.msra.mxu0 0.0
    %138 = vmatpush.msra.mxu0 0.0
    %139 = vmatpush.msra.mxu0 0.0
    %140 = vmatpush.msra.mxu0 0.0
    %141 = vmatpush.msra.mxu0 0.0
    %142 = vmatpush.msra.mxu0 0.0
    %143 = vmatpush.msra.mxu0 0.0
    %144 = vmatpush.msra.mxu0 0.0
    %145 = vmatpush.msra.mxu0 %v59
    %146 = vmatpush.msra.mxu0 %v57
    %147 = vmatmul.f32.gmra.mxu0 %v109
    %v148 = vpop.f32.mrf.mxu0
    %v149 = vadd.f32 %v105, %v148
    %150 = vdwg.mxu0
    %v151 = vld [vmem:[%s4] sm:$0x3]
    %v153 = vperm.slane %v151, 0
    %v154 = vperm.slane %v151, 1
    %v157 = vadd.f32 %v129, %v153
    %v158 = vadd.f32 %v149, %v154
    %vm159 = vcmask 1041408
    %v160 = vsel %vm159, %v157, 0.0
    %v161 = vrot.slane %v160, 4
    %v162 = vadd.f32 %v160, %v161
    %v163 = vrot.slane %v162, 2
    %v164 = vadd.f32 %v162, %v163
    %v165 = vrot.slane %v164, 1
    %v166 = vadd.f32 %v164, %v165
    %v167 = vsel %vm159, %v158, 0.0
    %v168 = vrot.slane %v167, 4
    %v169 = vadd.f32 %v167, %v168
    %v170 = vrot.slane %v169, 2
    %v171 = vadd.f32 %v169, %v170
    %v172 = vrot.slane %v171, 1
    %v173 = vadd.f32 %v171, %v172
    %v174 = vmul.f32 %v157, %v157
    %v175 = vmul.f32 %v158, %v158
    %v176 = vsel %vm159, %v174, 0.0
    %v177 = vrot.slane %v176, 4
    %v178 = vadd.f32 %v176, %v177
    %v179 = vrot.slane %v178, 2
    %v180 = vadd.f32 %v178, %v179
    %v181 = vrot.slane %v180, 1
    %v182 = vadd.f32 %v180, %v181
    %v183 = vsel %vm159, %v175, 0.0
    %v184 = vrot.slane %v183, 4
    %v185 = vadd.f32 %v183, %v184
    %v186 = vrot.slane %v185, 2
    %v187 = vadd.f32 %v185, %v186
    %v188 = vrot.slane %v187, 1
    %v189 = vadd.f32 %v187, %v188
    %vm190 = vcmask 1040384
    %v191 = vsel %vm190, %v166, %v182
    %v192 = vsel %vm190, %v173, %v189
    %v193 = vld [vmem:[%s5] sm:$0xff]
    %v194 = vld [vmem:[%s5 + $0x8] sm:$0xff]
    %v195 = vld [vmem:[%s5 + $0x10] sm:$0xff]
    %v196 = vld [vmem:[%s5 + $0x18] sm:$0xff]
    %v197 = vld [vmem:[%s5 + $0x20] sm:$0xff]
    %v198 = vld [vmem:[%s5 + $0x28] sm:$0xff]
    %v199 = vld [vmem:[%s5 + $0x30] sm:$0xff]
    %v200 = vld [vmem:[%s5 + $0x38] sm:$0xff]
    %v201 = vld [vmem:[%s5 + $0x40] sm:$0xff]
    %v202 = vld [vmem:[%s5 + $0x48] sm:$0xff]
    %v203 = vld [vmem:[%s5 + $0x50] sm:$0xff]
    %v204 = vld [vmem:[%s5 + $0x58] sm:$0xff]
    %v205 = vld [vmem:[%s5 + $0x60] sm:$0xff]
    %v206 = vld [vmem:[%s5 + $0x68] sm:$0xff]
    %v207 = vld [vmem:[%s5 + $0x70] sm:$0xff]
    %v208 = vld [vmem:[%s5 + $0x78] sm:$0xff]
    %v209 = vld [vmem:[%s5 + $0x80] sm:$0xff]
    %v210 = vld [vmem:[%s5 + $0x88] sm:$0xff]
    %v211 = vld [vmem:[%s5 + $0x90] sm:$0xff]
    %v212 = vld [vmem:[%s5 + $0x98] sm:$0xff]
    %v213 = vld [vmem:[%s5 + $0xa0] sm:$0xff]
    %v214 = vld [vmem:[%s5 + $0xa8] sm:$0xff]
    %v215 = vld [vmem:[%s5 + $0xb0] sm:$0xff]
    %v216 = vld [vmem:[%s5 + $0xb8] sm:$0xff]
    %v217 = vld [vmem:[%s5 + $0xc0] sm:$0xff]
    %v218 = vld [vmem:[%s5 + $0xc8] sm:$0xff]
    %v219 = vld [vmem:[%s5 + $0xd0] sm:$0xff]
    %v220 = vld [vmem:[%s5 + $0xd8] sm:$0xff]
    %v221 = vld [vmem:[%s5 + $0xe0] sm:$0xff]
    %v222 = vld [vmem:[%s5 + $0xe8] sm:$0xff]
    %v223 = vld [vmem:[%s5 + $0xf0] sm:$0xff]
    %v224 = vld [vmem:[%s5 + $0xf8] sm:$0xff]
    %225 = vmatpush.msra.mxu0 %v208
    %226 = vmatpush.msra.mxu0 %v207
    %227 = vmatpush.msra.mxu0 %v206
    %228 = vmatpush.msra.mxu0 %v205
    %229 = vmatpush.msra.mxu0 %v204
    %230 = vmatpush.msra.mxu0 %v203
    %231 = vmatpush.msra.mxu0 %v202
    %232 = vmatpush.msra.mxu0 %v201
    %233 = vmatpush.msra.mxu0 %v200
    %234 = vmatpush.msra.mxu0 %v199
    %235 = vmatpush.msra.mxu0 %v198
    %236 = vmatpush.msra.mxu0 %v197
    %237 = vmatpush.msra.mxu0 %v196
    %238 = vmatpush.msra.mxu0 %v195
    %239 = vmatpush.msra.mxu0 %v194
    %240 = vmatpush.msra.mxu0 %v193
    %241 = vmatmul.f32.gmra.mxu0 %v191
    %v242 = vpop.f32.mrf.mxu0
    %v243 = vadd.f32 0.0, %v242
    %244 = vdwg.mxu0
    %245 = vmatpush.msra.mxu0 %v224
    %246 = vmatpush.msra.mxu0 %v223
    %247 = vmatpush.msra.mxu0 %v222
    %248 = vmatpush.msra.mxu0 %v221
    %249 = vmatpush.msra.mxu0 %v220
    %250 = vmatpush.msra.mxu0 %v219
    %251 = vmatpush.msra.mxu0 %v218
    %252 = vmatpush.msra.mxu0 %v217
    %253 = vmatpush.msra.mxu0 %v216
    %254 = vmatpush.msra.mxu0 %v215
    %255 = vmatpush.msra.mxu0 %v214
    %256 = vmatpush.msra.mxu0 %v213
    %257 = vmatpush.msra.mxu0 %v212
    %258 = vmatpush.msra.mxu0 %v211
    %259 = vmatpush.msra.mxu0 %v210
    %260 = vmatpush.msra.mxu0 %v209
    %261 = vmatmul.f32.gmra.mxu0 %v192
    %v262 = vpop.f32.mrf.mxu0
    %v263 = vadd.f32 %v243, %v262
    %264 = vdwg.mxu0
    %v265 = vmul.f32 %v263, 0.5
    %v266 = vmul.f32 %v265, %v265
    %v268 = vrot.slane %v266, 7
    %v270 = vsub.f32 %v265, %v268
    %v271 = vmax.f32 %v270, 0.0
    %v272 = vadd.f32 %v271, 1e-05
    %v273 = vrsqrt.pop %v272
    %v274 = vmul.f32 %v273, %v272
    %v275 = vmul.f32 %v274, %v273
    %v276 = vmul.f32 0.5, %v275
    %v277 = vsub.f32 1.5, %v276
    %v278 = vmul.f32 %v273, %v277
    %vm279 = vweird.f32 %v272
    %vm280 = vweird.f32 %v273
    %vm281 = vmor %vm279, %vm280
    %v282 = vsel %vm281, %v273, %v278
    %v283 = vsub.f32 0.0, %v265
    %v285 = vrot.slane %v282, 1
    %v287 = vmul.f32 %v283, %v285
    %v289 = vrot.slane %v287, 7
    %v291 = vsel %vm190, %v285, %v289
    %v292 = vld [vmem:[%s6] sm:$0xff]
    %v293 = vld [vmem:[%s6 + $0x8] sm:$0xff]
    %v294 = vld [vmem:[%s6 + $0x10] sm:$0xff]
    %v295 = vld [vmem:[%s6 + $0x18] sm:$0xff]
    %v297 = vsel %vm107, %v291, 0
    %299 = vmatpush.msra.mxu0 0.0
    %300 = vmatpush.msra.mxu0 0.0
    %301 = vmatpush.msra.mxu0 0.0
    %302 = vmatpush.msra.mxu0 0.0
    %303 = vmatpush.msra.mxu0 0.0
    %304 = vmatpush.msra.mxu0 0.0
    %305 = vmatpush.msra.mxu0 0.0
    %306 = vmatpush.msra.mxu0 0.0
    %307 = vmatpush.msra.mxu0 0.0
    %308 = vmatpush.msra.mxu0 0.0
    %309 = vmatpush.msra.mxu0 0.0
    %310 = vmatpush.msra.mxu0 0.0
    %311 = vmatpush.msra.mxu0 0.0
    %312 = vmatpush.msra.mxu0 0.0
    %313 = vmatpush.msra.mxu0 %v294
    %314 = vmatpush.msra.mxu0 %v292
    %315 = vmatmul.f32.gmra.mxu0 %v297
    %v316 = vpop.f32.mrf.mxu0
    %v317 = vadd.f32 0.0, %v316
    %318 = vdwg.mxu0
    %319 = vmatpush.msra.mxu0 0.0
    %320 = vmatpush.msra.mxu0 0.0
    %321 = vmatpush.msra.mxu0 0.0
    %322 = vmatpush.msra.mxu0 0.0
    %323 = vmatpush.msra.mxu0 0.0
    %324 = vmatpush.msra.mxu0 0.0
    %325 = vmatpush.msra.mxu0 0.0
    %326 = vmatpush.msra.mxu0 0.0
    %327 = vmatpush.msra.mxu0 0.0
    %328 = vmatpush.msra.mxu0 0.0
    %329 = vmatpush.msra.mxu0 0.0
    %330 = vmatpush.msra.mxu0 0.0
    %331 = vmatpush.msra.mxu0 0.0
    %332 = vmatpush.msra.mxu0 0.0
    %333 = vmatpush.msra.mxu0 %v295
    %334 = vmatpush.msra.mxu0 %v293
    %335 = vmatmul.f32.gmra.mxu0 %v297
    %v336 = vpop.f32.mrf.mxu0
    %v337 = vadd.f32 0.0, %v336
    %338 = vdwg.mxu0
    %v339 = vperm.slane %v317, 0
    %v340 = vperm.slane %v337, 0
    %v341 = vmul.f32 %v157, %v339
    %v342 = vmul.f32 %v158, %v340
    %v343 = vperm.slane %v317, 1
    %v344 = vperm.slane %v337, 1
    %v345 = vadd.f32 %v341, %v343
    %v346 = vadd.f32 %v342, %v344
    %v347 = vmax.f32 %v345, 0.0
    %v348 = vmax.f32 %v346, 0.0
    %v349 = vpack.c.bf16 %v347, %v347
    %v350 = vpack.c.bf16 %v348, %v348
    %v351 = vld [vmem:[%s7] sm:$0xff]
    %v352 = vld [vmem:[%s7 + $0x8] sm:$0xff]
    %v353 = vld [vmem:[%s7 + $0x10] sm:$0xff]
    %v354 = vld [vmem:[%s7 + $0x18] sm:$0xff]
    %v355 = vld [vmem:[%s7 + $0x20] sm:$0xff]
    %v356 = vld [vmem:[%s7 + $0x28] sm:$0xff]
    %v357 = vld [vmem:[%s7 + $0x30] sm:$0xff]
    %v358 = vld [vmem:[%s7 + $0x38] sm:$0xff]
    %v359 = vld [vmem:[%s7 + $0x40] sm:$0xff]
    %v360 = vld [vmem:[%s7 + $0x48] sm:$0xff]
    %v361 = vld [vmem:[%s7 + $0x50] sm:$0xff]
    %v362 = vld [vmem:[%s7 + $0x58] sm:$0xff]
    %v363 = vld [vmem:[%s7 + $0x60] sm:$0xff]
    %v364 = vld [vmem:[%s7 + $0x68] sm:$0xff]
    %v365 = vld [vmem:[%s7 + $0x70] sm:$0xff]
    %v366 = vld [vmem:[%s7 + $0x78] sm:$0xff]
    %v367 = vld [vmem:[%s7 + $0x80] sm:$0xff]
    %v368 = vld [vmem:[%s7 + $0x88] sm:$0xff]
    %v369 = vld [vmem:[%s7 + $0x90] sm:$0xff]
    %v370 = vld [vmem:[%s7 + $0x98] sm:$0xff]
    %v371 = vld [vmem:[%s7 + $0xa0] sm:$0xff]
    %v372 = vld [vmem:[%s7 + $0xa8] sm:$0xff]
    %v373 = vld [vmem:[%s7 + $0xb0] sm:$0xff]
    %v374 = vld [vmem:[%s7 + $0xb8] sm:$0xff]
    %v375 = vld [vmem:[%s7 + $0xc0] sm:$0xff]
    %v376 = vld [vmem:[%s7 + $0xc8] sm:$0xff]
    %v377 = vld [vmem:[%s7 + $0xd0] sm:$0xff]
    %v378 = vld [vmem:[%s7 + $0xd8] sm:$0xff]
    %v379 = vld [vmem:[%s7 + $0xe0] sm:$0xff]
    %v380 = vld [vmem:[%s7 + $0xe8] sm:$0xff]
    %v381 = vld [vmem:[%s7 + $0xf0] sm:$0xff]
    %v382 = vld [vmem:[%s7 + $0xf8] sm:$0xff]
    %v383 = vld [vmem:[%s7 + $0x100] sm:$0xff]
    %v384 = vld [vmem:[%s7 + $0x108] sm:$0xff]
    %v385 = vld [vmem:[%s7 + $0x110] sm:$0xff]
    %v386 = vld [vmem:[%s7 + $0x118] sm:$0xff]
    %v387 = vld [vmem:[%s7 + $0x120] sm:$0xff]
    %v388 = vld [vmem:[%s7 + $0x128] sm:$0xff]
    %v389 = vld [vmem:[%s7 + $0x130] sm:$0xff]
    %v390 = vld [vmem:[%s7 + $0x138] sm:$0xff]
    %v391 = vld [vmem:[%s7 + $0x140] sm:$0xff]
    %v392 = vld [vmem:[%s7 + $0x148] sm:$0xff]
    %v393 = vld [vmem:[%s7 + $0x150] sm:$0xff]
    %v394 = vld [vmem:[%s7 + $0x158] sm:$0xff]
    %v395 = vld [vmem:[%s7 + $0x160] sm:$0xff]
    %v396 = vld [vmem:[%s7 + $0x168] sm:$0xff]
    %v397 = vld [vmem:[%s7 + $0x170] sm:$0xff]
    %v398 = vld [vmem:[%s7 + $0x178] sm:$0xff]
    %v399 = vld [vmem:[%s7 + $0x180] sm:$0xff]
    %v400 = vld [vmem:[%s7 + $0x188] sm:$0xff]
    %v401 = vld [vmem:[%s7 + $0x190] sm:$0xff]
    %v402 = vld [vmem:[%s7 + $0x198] sm:$0xff]
    %v403 = vld [vmem:[%s7 + $0x1a0] sm:$0xff]
    %v404 = vld [vmem:[%s7 + $0x1a8] sm:$0xff]
    %v405 = vld [vmem:[%s7 + $0x1b0] sm:$0xff]
    %v406 = vld [vmem:[%s7 + $0x1b8] sm:$0xff]
    %v407 = vld [vmem:[%s7 + $0x1c0] sm:$0xff]
    %v408 = vld [vmem:[%s7 + $0x1c8] sm:$0xff]
    %v409 = vld [vmem:[%s7 + $0x1d0] sm:$0xff]
    %v410 = vld [vmem:[%s7 + $0x1d8] sm:$0xff]
    %v411 = vld [vmem:[%s7 + $0x1e0] sm:$0xff]
    %v412 = vld [vmem:[%s7 + $0x1e8] sm:$0xff]
    %v413 = vld [vmem:[%s7 + $0x1f0] sm:$0xff]
    %v414 = vld [vmem:[%s7 + $0x1f8] sm:$0xff]
    %v479 = vunpack.c.l.b16 %v351
    %v480 = vunpack.c.h.b16 %v351
    %v481 = vunpack.c.l.b16 %v352
    %v482 = vunpack.c.h.b16 %v352
    %v483 = vunpack.c.l.b16 %v353
    %v484 = vunpack.c.h.b16 %v353
    %v485 = vunpack.c.l.b16 %v354
    %v486 = vunpack.c.h.b16 %v354
    %v487 = vunpack.c.l.b16 %v355
    %v488 = vunpack.c.h.b16 %v355
    %v489 = vunpack.c.l.b16 %v356
    %v490 = vunpack.c.h.b16 %v356
    %v491 = vunpack.c.l.b16 %v357
    %v492 = vunpack.c.h.b16 %v357
    %v493 = vunpack.c.l.b16 %v358
    %v494 = vunpack.c.h.b16 %v358
    %v495 = vunpack.c.l.b16 %v359
    %v496 = vunpack.c.h.b16 %v359
    %v497 = vunpack.c.l.b16 %v360
    %v498 = vunpack.c.h.b16 %v360
    %v499 = vunpack.c.l.b16 %v361
    %v500 = vunpack.c.h.b16 %v361
    %v501 = vunpack.c.l.b16 %v362
    %v502 = vunpack.c.h.b16 %v362
    %v503 = vunpack.c.l.b16 %v363
    %v504 = vunpack.c.h.b16 %v363
    %v505 = vunpack.c.l.b16 %v364
    %v506 = vunpack.c.h.b16 %v364
    %v507 = vunpack.c.l.b16 %v365
    %v508 = vunpack.c.h.b16 %v365
    %v509 = vunpack.c.l.b16 %v366
    %v510 = vunpack.c.h.b16 %v366
    %v511 = vunpack.c.l.b16 %v367
    %v512 = vunpack.c.h.b16 %v367
    %v513 = vunpack.c.l.b16 %v368
    %v514 = vunpack.c.h.b16 %v368
    %v515 = vunpack.c.l.b16 %v369
    %v516 = vunpack.c.h.b16 %v369
    %v517 = vunpack.c.l.b16 %v370
    %v518 = vunpack.c.h.b16 %v370
    %v519 = vunpack.c.l.b16 %v371
    %v520 = vunpack.c.h.b16 %v371
    %v521 = vunpack.c.l.b16 %v372
    %v522 = vunpack.c.h.b16 %v372
    %v523 = vunpack.c.l.b16 %v373
    %v524 = vunpack.c.h.b16 %v373
    %v525 = vunpack.c.l.b16 %v374
    %v526 = vunpack.c.h.b16 %v374
    %v527 = vunpack.c.l.b16 %v375
    %v528 = vunpack.c.h.b16 %v375
    %v529 = vunpack.c.l.b16 %v376
    %v530 = vunpack.c.h.b16 %v376
    %v531 = vunpack.c.l.b16 %v377
    %v532 = vunpack.c.h.b16 %v377
    %v533 = vunpack.c.l.b16 %v378
    %v534 = vunpack.c.h.b16 %v378
    %v535 = vunpack.c.l.b16 %v379
    %v536 = vunpack.c.h.b16 %v379
    %v537 = vunpack.c.l.b16 %v380
    %v538 = vunpack.c.h.b16 %v380
    %v539 = vunpack.c.l.b16 %v381
    %v540 = vunpack.c.h.b16 %v381
    %v541 = vunpack.c.l.b16 %v382
    %v542 = vunpack.c.h.b16 %v382
    %v543 = vunpack.c.l.b16 %v383
    %v544 = vunpack.c.h.b16 %v383
    %v545 = vunpack.c.l.b16 %v384
    %v546 = vunpack.c.h.b16 %v384
    %v547 = vunpack.c.l.b16 %v385
    %v548 = vunpack.c.h.b16 %v385
    %v549 = vunpack.c.l.b16 %v386
    %v550 = vunpack.c.h.b16 %v386
    %v551 = vunpack.c.l.b16 %v387
    %v552 = vunpack.c.h.b16 %v387
    %v553 = vunpack.c.l.b16 %v388
    %v554 = vunpack.c.h.b16 %v388
    %v555 = vunpack.c.l.b16 %v389
    %v556 = vunpack.c.h.b16 %v389
    %v557 = vunpack.c.l.b16 %v390
    %v558 = vunpack.c.h.b16 %v390
    %v559 = vunpack.c.l.b16 %v391
    %v560 = vunpack.c.h.b16 %v391
    %v561 = vunpack.c.l.b16 %v392
    %v562 = vunpack.c.h.b16 %v392
    %v563 = vunpack.c.l.b16 %v393
    %v564 = vunpack.c.h.b16 %v393
    %v565 = vunpack.c.l.b16 %v394
    %v566 = vunpack.c.h.b16 %v394
    %v567 = vunpack.c.l.b16 %v395
    %v568 = vunpack.c.h.b16 %v395
    %v569 = vunpack.c.l.b16 %v396
    %v570 = vunpack.c.h.b16 %v396
    %v571 = vunpack.c.l.b16 %v397
    %v572 = vunpack.c.h.b16 %v397
    %v573 = vunpack.c.l.b16 %v398
    %v574 = vunpack.c.h.b16 %v398
    %v575 = vunpack.c.l.b16 %v399
    %v576 = vunpack.c.h.b16 %v399
    %v577 = vunpack.c.l.b16 %v400
    %v578 = vunpack.c.h.b16 %v400
    %v579 = vunpack.c.l.b16 %v401
    %v580 = vunpack.c.h.b16 %v401
    %v581 = vunpack.c.l.b16 %v402
    %v582 = vunpack.c.h.b16 %v402
    %v583 = vunpack.c.l.b16 %v403
    %v584 = vunpack.c.h.b16 %v403
    %v585 = vunpack.c.l.b16 %v404
    %v586 = vunpack.c.h.b16 %v404
    %v587 = vunpack.c.l.b16 %v405
    %v588 = vunpack.c.h.b16 %v405
    %v589 = vunpack.c.l.b16 %v406
    %v590 = vunpack.c.h.b16 %v406
    %v591 = vunpack.c.l.b16 %v407
    %v592 = vunpack.c.h.b16 %v407
    %v593 = vunpack.c.l.b16 %v408
    %v594 = vunpack.c.h.b16 %v408
    %v595 = vunpack.c.l.b16 %v409
    %v596 = vunpack.c.h.b16 %v409
    %v597 = vunpack.c.l.b16 %v410
    %v598 = vunpack.c.h.b16 %v410
    %v599 = vunpack.c.l.b16 %v411
    %v600 = vunpack.c.h.b16 %v411
    %v601 = vunpack.c.l.b16 %v412
    %v602 = vunpack.c.h.b16 %v412
    %v603 = vunpack.c.l.b16 %v413
    %v604 = vunpack.c.h.b16 %v413
    %v605 = vunpack.c.l.b16 %v414
    %v606 = vunpack.c.h.b16 %v414
    %v607 = vpack.c.b16 %v483, %v479
    %v608 = vpack.c.b16 %v484, %v480
    %v609 = vpack.c.b16 %v485, %v481
    %v610 = vpack.c.b16 %v486, %v482
    %v611 = vpack.c.b16 %v491, %v487
    %v612 = vpack.c.b16 %v492, %v488
    %v613 = vpack.c.b16 %v493, %v489
    %v614 = vpack.c.b16 %v494, %v490
    %v615 = vpack.c.b16 %v499, %v495
    %v616 = vpack.c.b16 %v500, %v496
    %v617 = vpack.c.b16 %v501, %v497
    %v618 = vpack.c.b16 %v502, %v498
    %v619 = vpack.c.b16 %v507, %v503
    %v620 = vpack.c.b16 %v508, %v504
    %v621 = vpack.c.b16 %v509, %v505
    %v622 = vpack.c.b16 %v510, %v506
    %v623 = vpack.c.b16 %v515, %v511
    %v624 = vpack.c.b16 %v516, %v512
    %v625 = vpack.c.b16 %v517, %v513
    %v626 = vpack.c.b16 %v518, %v514
    %v627 = vpack.c.b16 %v523, %v519
    %v628 = vpack.c.b16 %v524, %v520
    %v629 = vpack.c.b16 %v525, %v521
    %v630 = vpack.c.b16 %v526, %v522
    %v631 = vpack.c.b16 %v531, %v527
    %v632 = vpack.c.b16 %v532, %v528
    %v633 = vpack.c.b16 %v533, %v529
    %v634 = vpack.c.b16 %v534, %v530
    %v635 = vpack.c.b16 %v539, %v535
    %v636 = vpack.c.b16 %v540, %v536
    %v637 = vpack.c.b16 %v541, %v537
    %v638 = vpack.c.b16 %v542, %v538
    %v639 = vpack.c.b16 %v547, %v543
    %v640 = vpack.c.b16 %v548, %v544
    %v641 = vpack.c.b16 %v549, %v545
    %v642 = vpack.c.b16 %v550, %v546
    %v643 = vpack.c.b16 %v555, %v551
    %v644 = vpack.c.b16 %v556, %v552
    %v645 = vpack.c.b16 %v557, %v553
    %v646 = vpack.c.b16 %v558, %v554
    %v647 = vpack.c.b16 %v563, %v559
    %v648 = vpack.c.b16 %v564, %v560
    %v649 = vpack.c.b16 %v565, %v561
    %v650 = vpack.c.b16 %v566, %v562
    %v651 = vpack.c.b16 %v571, %v567
    %v652 = vpack.c.b16 %v572, %v568
    %v653 = vpack.c.b16 %v573, %v569
    %v654 = vpack.c.b16 %v574, %v570
    %v655 = vpack.c.b16 %v579, %v575
    %v656 = vpack.c.b16 %v580, %v576
    %v657 = vpack.c.b16 %v581, %v577
    %v658 = vpack.c.b16 %v582, %v578
    %v659 = vpack.c.b16 %v587, %v583
    %v660 = vpack.c.b16 %v588, %v584
    %v661 = vpack.c.b16 %v589, %v585
    %v662 = vpack.c.b16 %v590, %v586
    %v663 = vpack.c.b16 %v595, %v591
    %v664 = vpack.c.b16 %v596, %v592
    %v665 = vpack.c.b16 %v597, %v593
    %v666 = vpack.c.b16 %v598, %v594
    %v667 = vpack.c.b16 %v603, %v599
    %v668 = vpack.c.b16 %v604, %v600
    %v669 = vpack.c.b16 %v605, %v601
    %v670 = vpack.c.b16 %v606, %v602
    %735 = vmatpush.bf16.msra.mxu0 %v635
    %736 = vmatpush.bf16.msra.mxu0 %v631
    %737 = vmatpush.bf16.msra.mxu0 %v627
    %738 = vmatpush.bf16.msra.mxu0 %v623
    %739 = vmatpush.bf16.msra.mxu0 %v619
    %740 = vmatpush.bf16.msra.mxu0 %v615
    %741 = vmatpush.bf16.msra.mxu0 %v611
    %742 = vmatpush.bf16.msra.mxu0 %v607
    %743 = vmatmul.bf16.gmra.mxu0 %v349
    %v744 = vpop.f32.mrf.mxu0
    %v745 = vadd.f32 0.0, %v744
    %v746 = vpop.f32.mrf.mxu0
    %747 = vdwg.mxu0
    %748 = vmatpush.bf16.msra.mxu0 %v667
    %749 = vmatpush.bf16.msra.mxu0 %v663
    %750 = vmatpush.bf16.msra.mxu0 %v659
    %751 = vmatpush.bf16.msra.mxu0 %v655
    %752 = vmatpush.bf16.msra.mxu0 %v651
    %753 = vmatpush.bf16.msra.mxu0 %v647
    %754 = vmatpush.bf16.msra.mxu0 %v643
    %755 = vmatpush.bf16.msra.mxu0 %v639
    %756 = vmatmul.bf16.gmra.mxu0 %v350
    %v757 = vpop.f32.mrf.mxu0
    %v758 = vadd.f32 %v745, %v757
    %v759 = vpop.f32.mrf.mxu0
    %760 = vdwg.mxu0
    %761 = vmatpush.bf16.msra.mxu0 %v636
    %762 = vmatpush.bf16.msra.mxu0 %v632
    %763 = vmatpush.bf16.msra.mxu0 %v628
    %764 = vmatpush.bf16.msra.mxu0 %v624
    %765 = vmatpush.bf16.msra.mxu0 %v620
    %766 = vmatpush.bf16.msra.mxu0 %v616
    %767 = vmatpush.bf16.msra.mxu0 %v612
    %768 = vmatpush.bf16.msra.mxu0 %v608
    %769 = vmatmul.bf16.gmra.mxu0 %v349
    %v770 = vpop.f32.mrf.mxu0
    %v771 = vadd.f32 0.0, %v770
    %v772 = vpop.f32.mrf.mxu0
    %773 = vdwg.mxu0
    %774 = vmatpush.bf16.msra.mxu0 %v668
    %775 = vmatpush.bf16.msra.mxu0 %v664
    %776 = vmatpush.bf16.msra.mxu0 %v660
    %777 = vmatpush.bf16.msra.mxu0 %v656
    %778 = vmatpush.bf16.msra.mxu0 %v652
    %779 = vmatpush.bf16.msra.mxu0 %v648
    %780 = vmatpush.bf16.msra.mxu0 %v644
    %781 = vmatpush.bf16.msra.mxu0 %v640
    %782 = vmatmul.bf16.gmra.mxu0 %v350
    %v783 = vpop.f32.mrf.mxu0
    %v784 = vadd.f32 %v771, %v783
    %v785 = vpop.f32.mrf.mxu0
    %786 = vdwg.mxu0
    %787 = vmatpush.bf16.msra.mxu0 %v637
    %788 = vmatpush.bf16.msra.mxu0 %v633
    %789 = vmatpush.bf16.msra.mxu0 %v629
    %790 = vmatpush.bf16.msra.mxu0 %v625
    %791 = vmatpush.bf16.msra.mxu0 %v621
    %792 = vmatpush.bf16.msra.mxu0 %v617
    %793 = vmatpush.bf16.msra.mxu0 %v613
    %794 = vmatpush.bf16.msra.mxu0 %v609
    %795 = vmatmul.bf16.gmra.mxu0 %v349
    %v796 = vpop.f32.mrf.mxu0
    %v797 = vadd.f32 0.0, %v796
    %v798 = vpop.f32.mrf.mxu0
    %799 = vdwg.mxu0
    %800 = vmatpush.bf16.msra.mxu0 %v669
    %801 = vmatpush.bf16.msra.mxu0 %v665
    %802 = vmatpush.bf16.msra.mxu0 %v661
    %803 = vmatpush.bf16.msra.mxu0 %v657
    %804 = vmatpush.bf16.msra.mxu0 %v653
    %805 = vmatpush.bf16.msra.mxu0 %v649
    %806 = vmatpush.bf16.msra.mxu0 %v645
    %807 = vmatpush.bf16.msra.mxu0 %v641
    %808 = vmatmul.bf16.gmra.mxu0 %v350
    %v809 = vpop.f32.mrf.mxu0
    %v810 = vadd.f32 %v797, %v809
    %v811 = vpop.f32.mrf.mxu0
    %812 = vdwg.mxu0
    %813 = vmatpush.bf16.msra.mxu0 %v638
    %814 = vmatpush.bf16.msra.mxu0 %v634
    %815 = vmatpush.bf16.msra.mxu0 %v630
    %816 = vmatpush.bf16.msra.mxu0 %v626
    %817 = vmatpush.bf16.msra.mxu0 %v622
    %818 = vmatpush.bf16.msra.mxu0 %v618
    %819 = vmatpush.bf16.msra.mxu0 %v614
    %820 = vmatpush.bf16.msra.mxu0 %v610
    %821 = vmatmul.bf16.gmra.mxu0 %v349
    %v822 = vpop.f32.mrf.mxu0
    %v823 = vadd.f32 0.0, %v822
    %v824 = vpop.f32.mrf.mxu0
    %825 = vdwg.mxu0
    %826 = vmatpush.bf16.msra.mxu0 %v670
    %827 = vmatpush.bf16.msra.mxu0 %v666
    %828 = vmatpush.bf16.msra.mxu0 %v662
    %829 = vmatpush.bf16.msra.mxu0 %v658
    %830 = vmatpush.bf16.msra.mxu0 %v654
    %831 = vmatpush.bf16.msra.mxu0 %v650
    %832 = vmatpush.bf16.msra.mxu0 %v646
    %833 = vmatpush.bf16.msra.mxu0 %v642
    %834 = vmatmul.bf16.gmra.mxu0 %v350
    %v835 = vpop.f32.mrf.mxu0
    %v836 = vadd.f32 %v823, %v835
    %v837 = vpop.f32.mrf.mxu0
    %838 = vdwg.mxu0
    %v839 = vsel %vm159, %v758, 0.0
    %v840 = vrot.slane %v839, 4
    %v841 = vadd.f32 %v839, %v840
    %v842 = vrot.slane %v841, 2
    %v843 = vadd.f32 %v841, %v842
    %v844 = vrot.slane %v843, 1
    %v845 = vadd.f32 %v843, %v844
    %v846 = vsel %vm159, %v784, 0.0
    %v847 = vrot.slane %v846, 4
    %v848 = vadd.f32 %v846, %v847
    %v849 = vrot.slane %v848, 2
    %v850 = vadd.f32 %v848, %v849
    %v851 = vrot.slane %v850, 1
    %v852 = vadd.f32 %v850, %v851
    %v853 = vsel %vm159, %v810, 0.0
    %v854 = vrot.slane %v853, 4
    %v855 = vadd.f32 %v853, %v854
    %v856 = vrot.slane %v855, 2
    %v857 = vadd.f32 %v855, %v856
    %v858 = vrot.slane %v857, 1
    %v859 = vadd.f32 %v857, %v858
    %v860 = vsel %vm159, %v836, 0.0
    %v861 = vrot.slane %v860, 4
    %v862 = vadd.f32 %v860, %v861
    %v863 = vrot.slane %v862, 2
    %v864 = vadd.f32 %v862, %v863
    %v865 = vrot.slane %v864, 1
    %v866 = vadd.f32 %v864, %v865
    %v867 = vmul.f32 %v758, %v758
    %v868 = vmul.f32 %v784, %v784
    %v869 = vmul.f32 %v810, %v810
    %v870 = vmul.f32 %v836, %v836
    %v871 = vsel %vm159, %v867, 0.0
    %v872 = vrot.slane %v871, 4
    %v873 = vadd.f32 %v871, %v872
    %v874 = vrot.slane %v873, 2
    %v875 = vadd.f32 %v873, %v874
    %v876 = vrot.slane %v875, 1
    %v877 = vadd.f32 %v875, %v876
    %v878 = vsel %vm159, %v868, 0.0
    %v879 = vrot.slane %v878, 4
    %v880 = vadd.f32 %v878, %v879
    %v881 = vrot.slane %v880, 2
    %v882 = vadd.f32 %v880, %v881
    %v883 = vrot.slane %v882, 1
    %v884 = vadd.f32 %v882, %v883
    %v885 = vsel %vm159, %v869, 0.0
    %v886 = vrot.slane %v885, 4
    %v887 = vadd.f32 %v885, %v886
    %v888 = vrot.slane %v887, 2
    %v889 = vadd.f32 %v887, %v888
    %v890 = vrot.slane %v889, 1
    %v891 = vadd.f32 %v889, %v890
    %v892 = vsel %vm159, %v870, 0.0
    %v893 = vrot.slane %v892, 4
    %v894 = vadd.f32 %v892, %v893
    %v895 = vrot.slane %v894, 2
    %v896 = vadd.f32 %v894, %v895
    %v897 = vrot.slane %v896, 1
    %v898 = vadd.f32 %v896, %v897
    %v899 = vsel %vm190, %v845, %v877
    %v900 = vsel %vm190, %v852, %v884
    %v901 = vsel %vm190, %v859, %v891
    %v902 = vsel %vm190, %v866, %v898
    %v903 = vld [vmem:[%s8] sm:$0xff]
    %v904 = vld [vmem:[%s8 + $0x8] sm:$0xff]
    %v905 = vld [vmem:[%s8 + $0x10] sm:$0xff]
    %v906 = vld [vmem:[%s8 + $0x18] sm:$0xff]
    %v907 = vld [vmem:[%s8 + $0x20] sm:$0xff]
    %v908 = vld [vmem:[%s8 + $0x28] sm:$0xff]
    %v909 = vld [vmem:[%s8 + $0x30] sm:$0xff]
    %v910 = vld [vmem:[%s8 + $0x38] sm:$0xff]
    %v911 = vld [vmem:[%s8 + $0x40] sm:$0xff]
    %v912 = vld [vmem:[%s8 + $0x48] sm:$0xff]
    %v913 = vld [vmem:[%s8 + $0x50] sm:$0xff]
    %v914 = vld [vmem:[%s8 + $0x58] sm:$0xff]
    %v915 = vld [vmem:[%s8 + $0x60] sm:$0xff]
    %v916 = vld [vmem:[%s8 + $0x68] sm:$0xff]
    %v917 = vld [vmem:[%s8 + $0x70] sm:$0xff]
    %v918 = vld [vmem:[%s8 + $0x78] sm:$0xff]
    %v919 = vld [vmem:[%s8 + $0x80] sm:$0xff]
    %v920 = vld [vmem:[%s8 + $0x88] sm:$0xff]
    %v921 = vld [vmem:[%s8 + $0x90] sm:$0xff]
    %v922 = vld [vmem:[%s8 + $0x98] sm:$0xff]
    %v923 = vld [vmem:[%s8 + $0xa0] sm:$0xff]
    %v924 = vld [vmem:[%s8 + $0xa8] sm:$0xff]
    %v925 = vld [vmem:[%s8 + $0xb0] sm:$0xff]
    %v926 = vld [vmem:[%s8 + $0xb8] sm:$0xff]
    %v927 = vld [vmem:[%s8 + $0xc0] sm:$0xff]
    %v928 = vld [vmem:[%s8 + $0xc8] sm:$0xff]
    %v929 = vld [vmem:[%s8 + $0xd0] sm:$0xff]
    %v930 = vld [vmem:[%s8 + $0xd8] sm:$0xff]
    %v931 = vld [vmem:[%s8 + $0xe0] sm:$0xff]
    %v932 = vld [vmem:[%s8 + $0xe8] sm:$0xff]
    %v933 = vld [vmem:[%s8 + $0xf0] sm:$0xff]
    %v934 = vld [vmem:[%s8 + $0xf8] sm:$0xff]
    %v935 = vld [vmem:[%s8 + $0x100] sm:$0xff]
    %v936 = vld [vmem:[%s8 + $0x108] sm:$0xff]
    %v937 = vld [vmem:[%s8 + $0x110] sm:$0xff]
    %v938 = vld [vmem:[%s8 + $0x118] sm:$0xff]
    %v939 = vld [vmem:[%s8 + $0x120] sm:$0xff]
    %v940 = vld [vmem:[%s8 + $0x128] sm:$0xff]
    %v941 = vld [vmem:[%s8 + $0x130] sm:$0xff]
    %v942 = vld [vmem:[%s8 + $0x138] sm:$0xff]
    %v943 = vld [vmem:[%s8 + $0x140] sm:$0xff]
    %v944 = vld [vmem:[%s8 + $0x148] sm:$0xff]
    %v945 = vld [vmem:[%s8 + $0x150] sm:$0xff]
    %v946 = vld [vmem:[%s8 + $0x158] sm:$0xff]
    %v947 = vld [vmem:[%s8 + $0x160] sm:$0xff]
    %v948 = vld [vmem:[%s8 + $0x168] sm:$0xff]
    %v949 = vld [vmem:[%s8 + $0x170] sm:$0xff]
    %v950 = vld [vmem:[%s8 + $0x178] sm:$0xff]
    %v951 = vld [vmem:[%s8 + $0x180] sm:$0xff]
    %v952 = vld [vmem:[%s8 + $0x188] sm:$0xff]
    %v953 = vld [vmem:[%s8 + $0x190] sm:$0xff]
    %v954 = vld [vmem:[%s8 + $0x198] sm:$0xff]
    %v955 = vld [vmem:[%s8 + $0x1a0] sm:$0xff]
    %v956 = vld [vmem:[%s8 + $0x1a8] sm:$0xff]
    %v957 = vld [vmem:[%s8 + $0x1b0] sm:$0xff]
    %v958 = vld [vmem:[%s8 + $0x1b8] sm:$0xff]
    %v959 = vld [vmem:[%s8 + $0x1c0] sm:$0xff]
    %v960 = vld [vmem:[%s8 + $0x1c8] sm:$0xff]
    %v961 = vld [vmem:[%s8 + $0x1d0] sm:$0xff]
    %v962 = vld [vmem:[%s8 + $0x1d8] sm:$0xff]
    %v963 = vld [vmem:[%s8 + $0x1e0] sm:$0xff]
    %v964 = vld [vmem:[%s8 + $0x1e8] sm:$0xff]
    %v965 = vld [vmem:[%s8 + $0x1f0] sm:$0xff]
    %v966 = vld [vmem:[%s8 + $0x1f8] sm:$0xff]
    %967 = vmatpush.msra.mxu0 %v918
    %968 = vmatpush.msra.mxu0 %v917
    %969 = vmatpush.msra.mxu0 %v916
    %970 = vmatpush.msra.mxu0 %v915
    %971 = vmatpush.msra.mxu0 %v914
    %972 = vmatpush.msra.mxu0 %v913
    %973 = vmatpush.msra.mxu0 %v912
    %974 = vmatpush.msra.mxu0 %v911
    %975 = vmatpush.msra.mxu0 %v910
    %976 = vmatpush.msra.mxu0 %v909
    %977 = vmatpush.msra.mxu0 %v908
    %978 = vmatpush.msra.mxu0 %v907
    %979 = vmatpush.msra.mxu0 %v906
    %980 = vmatpush.msra.mxu0 %v905
    %981 = vmatpush.msra.mxu0 %v904
    %982 = vmatpush.msra.mxu0 %v903
    %983 = vmatmul.f32.gmra.mxu0 %v899
    %v984 = vpop.f32.mrf.mxu0
    %v985 = vadd.f32 0.0, %v984
    %986 = vdwg.mxu0
    %987 = vmatpush.msra.mxu0 %v934
    %988 = vmatpush.msra.mxu0 %v933
    %989 = vmatpush.msra.mxu0 %v932
    %990 = vmatpush.msra.mxu0 %v931
    %991 = vmatpush.msra.mxu0 %v930
    %992 = vmatpush.msra.mxu0 %v929
    %993 = vmatpush.msra.mxu0 %v928
    %994 = vmatpush.msra.mxu0 %v927
    %995 = vmatpush.msra.mxu0 %v926
    %996 = vmatpush.msra.mxu0 %v925
    %997 = vmatpush.msra.mxu0 %v924
    %998 = vmatpush.msra.mxu0 %v923
    %999 = vmatpush.msra.mxu0 %v922
    %1000 = vmatpush.msra.mxu0 %v921
    %1001 = vmatpush.msra.mxu0 %v920
    %1002 = vmatpush.msra.mxu0 %v919
    %1003 = vmatmul.f32.gmra.mxu0 %v900
    %v1004 = vpop.f32.mrf.mxu0
    %v1005 = vadd.f32 %v985, %v1004
    %1006 = vdwg.mxu0
    %1007 = vmatpush.msra.mxu0 %v950
    %1008 = vmatpush.msra.mxu0 %v949
    %1009 = vmatpush.msra.mxu0 %v948
    %1010 = vmatpush.msra.mxu0 %v947
    %1011 = vmatpush.msra.mxu0 %v946
    %1012 = vmatpush.msra.mxu0 %v945
    %1013 = vmatpush.msra.mxu0 %v944
    %1014 = vmatpush.msra.mxu0 %v943
    %1015 = vmatpush.msra.mxu0 %v942
    %1016 = vmatpush.msra.mxu0 %v941
    %1017 = vmatpush.msra.mxu0 %v940
    %1018 = vmatpush.msra.mxu0 %v939
    %1019 = vmatpush.msra.mxu0 %v938
    %1020 = vmatpush.msra.mxu0 %v937
    %1021 = vmatpush.msra.mxu0 %v936
    %1022 = vmatpush.msra.mxu0 %v935
    %1023 = vmatmul.f32.gmra.mxu0 %v901
    %v1024 = vpop.f32.mrf.mxu0
    %v1025 = vadd.f32 %v1005, %v1024
    %1026 = vdwg.mxu0
    %1027 = vmatpush.msra.mxu0 %v966
    %1028 = vmatpush.msra.mxu0 %v965
    %1029 = vmatpush.msra.mxu0 %v964
    %1030 = vmatpush.msra.mxu0 %v963
    %1031 = vmatpush.msra.mxu0 %v962
    %1032 = vmatpush.msra.mxu0 %v961
    %1033 = vmatpush.msra.mxu0 %v960
    %1034 = vmatpush.msra.mxu0 %v959
    %1035 = vmatpush.msra.mxu0 %v958
    %1036 = vmatpush.msra.mxu0 %v957
    %1037 = vmatpush.msra.mxu0 %v956
    %1038 = vmatpush.msra.mxu0 %v955
    %1039 = vmatpush.msra.mxu0 %v954
    %1040 = vmatpush.msra.mxu0 %v953
    %1041 = vmatpush.msra.mxu0 %v952
    %1042 = vmatpush.msra.mxu0 %v951
    %1043 = vmatmul.f32.gmra.mxu0 %v902
    %v1044 = vpop.f32.mrf.mxu0
    %v1045 = vadd.f32 %v1025, %v1044
    %1046 = vdwg.mxu0
    %v1047 = vmul.f32 %v1045, 0.5
    %v1048 = vmul.f32 %v1047, %v1047
    %v1050 = vrot.slane %v1048, 7
    %v1052 = vsub.f32 %v1047, %v1050
    %v1053 = vmax.f32 %v1052, 0.0
    %v1054 = vadd.f32 %v1053, 1e-05
    %v1055 = vrsqrt.pop %v1054
    %v1056 = vmul.f32 %v1055, %v1054
    %v1057 = vmul.f32 %v1056, %v1055
    %v1058 = vmul.f32 0.5, %v1057
    %v1059 = vsub.f32 1.5, %v1058
    %v1060 = vmul.f32 %v1055, %v1059
    %vm1061 = vweird.f32 %v1054
    %vm1062 = vweird.f32 %v1055
    %vm1063 = vmor %vm1061, %vm1062
    %v1064 = vsel %vm1063, %v1055, %v1060
    %v1065 = vsub.f32 0.0, %v1047
    %v1067 = vrot.slane %v1064, 1
    %v1069 = vmul.f32 %v1065, %v1067
    %v1071 = vrot.slane %v1069, 7
    %v1073 = vsel %vm190, %v1067, %v1071
    %v1074 = vld [vmem:[%s9] sm:$0xff]
    %v1075 = vld [vmem:[%s9 + $0x8] sm:$0xff]
    %v1076 = vld [vmem:[%s9 + $0x10] sm:$0xff]
    %v1077 = vld [vmem:[%s9 + $0x18] sm:$0xff]
    %v1079 = vsel %vm63, %v1073, 0
    %1081 = vmatpush.msra.mxu0 0.0
    %1082 = vmatpush.msra.mxu0 0.0
    %1083 = vmatpush.msra.mxu0 0.0
    %1084 = vmatpush.msra.mxu0 0.0
    %1085 = vmatpush.msra.mxu0 0.0
    %1086 = vmatpush.msra.mxu0 0.0
    %1087 = vmatpush.msra.mxu0 0.0
    %1088 = vmatpush.msra.mxu0 0.0
    %1089 = vmatpush.msra.mxu0 0.0
    %1090 = vmatpush.msra.mxu0 0.0
    %1091 = vmatpush.msra.mxu0 0.0
    %1092 = vmatpush.msra.mxu0 0.0
    %1093 = vmatpush.msra.mxu0 0.0
    %1094 = vmatpush.msra.mxu0 0.0
    %1095 = vmatpush.msra.mxu0 0.0
    %1096 = vmatpush.msra.mxu0 %v1074
    %1097 = vmatmul.f32.gmra.mxu0 %v1079
    %v1098 = vpop.f32.mrf.mxu0
    %v1099 = vadd.f32 0.0, %v1098
    %1100 = vdwg.mxu0
    %1101 = vmatpush.msra.mxu0 0.0
    %1102 = vmatpush.msra.mxu0 0.0
    %1103 = vmatpush.msra.mxu0 0.0
    %1104 = vmatpush.msra.mxu0 0.0
    %1105 = vmatpush.msra.mxu0 0.0
    %1106 = vmatpush.msra.mxu0 0.0
    %1107 = vmatpush.msra.mxu0 0.0
    %1108 = vmatpush.msra.mxu0 0.0
    %1109 = vmatpush.msra.mxu0 0.0
    %1110 = vmatpush.msra.mxu0 0.0
    %1111 = vmatpush.msra.mxu0 0.0
    %1112 = vmatpush.msra.mxu0 0.0
    %1113 = vmatpush.msra.mxu0 0.0
    %1114 = vmatpush.msra.mxu0 0.0
    %1115 = vmatpush.msra.mxu0 0.0
    %1116 = vmatpush.msra.mxu0 %v1075
    %1117 = vmatmul.f32.gmra.mxu0 %v1079
    %v1118 = vpop.f32.mrf.mxu0
    %v1119 = vadd.f32 0.0, %v1118
    %1120 = vdwg.mxu0
    %1121 = vmatpush.msra.mxu0 0.0
    %1122 = vmatpush.msra.mxu0 0.0
    %1123 = vmatpush.msra.mxu0 0.0
    %1124 = vmatpush.msra.mxu0 0.0
    %1125 = vmatpush.msra.mxu0 0.0
    %1126 = vmatpush.msra.mxu0 0.0
    %1127 = vmatpush.msra.mxu0 0.0
    %1128 = vmatpush.msra.mxu0 0.0
    %1129 = vmatpush.msra.mxu0 0.0
    %1130 = vmatpush.msra.mxu0 0.0
    %1131 = vmatpush.msra.mxu0 0.0
    %1132 = vmatpush.msra.mxu0 0.0
    %1133 = vmatpush.msra.mxu0 0.0
    %1134 = vmatpush.msra.mxu0 0.0
    %1135 = vmatpush.msra.mxu0 0.0
    %1136 = vmatpush.msra.mxu0 %v1076
    %1137 = vmatmul.f32.gmra.mxu0 %v1079
    %v1138 = vpop.f32.mrf.mxu0
    %v1139 = vadd.f32 0.0, %v1138
    %1140 = vdwg.mxu0
    %1141 = vmatpush.msra.mxu0 0.0
    %1142 = vmatpush.msra.mxu0 0.0
    %1143 = vmatpush.msra.mxu0 0.0
    %1144 = vmatpush.msra.mxu0 0.0
    %1145 = vmatpush.msra.mxu0 0.0
    %1146 = vmatpush.msra.mxu0 0.0
    %1147 = vmatpush.msra.mxu0 0.0
    %1148 = vmatpush.msra.mxu0 0.0
    %1149 = vmatpush.msra.mxu0 0.0
    %1150 = vmatpush.msra.mxu0 0.0
    %1151 = vmatpush.msra.mxu0 0.0
    %1152 = vmatpush.msra.mxu0 0.0
    %1153 = vmatpush.msra.mxu0 0.0
    %1154 = vmatpush.msra.mxu0 0.0
    %1155 = vmatpush.msra.mxu0 0.0
    %1156 = vmatpush.msra.mxu0 %v1077
    %1157 = vmatmul.f32.gmra.mxu0 %v1079
    %v1158 = vpop.f32.mrf.mxu0
    %v1159 = vadd.f32 0.0, %v1158
    %1160 = vdwg.mxu0
    %v1161 = vperm.slane %v1099, 0
    %v1162 = vperm.slane %v1119, 0
    %v1163 = vperm.slane %v1139, 0
    %v1164 = vperm.slane %v1159, 0
    %v1165 = vmul.f32 %v758, %v1161
    %v1166 = vmul.f32 %v784, %v1162
    %v1167 = vmul.f32 %v810, %v1163
    %v1168 = vmul.f32 %v836, %v1164
    %v1169 = vperm.slane %v1099, 1
    %v1170 = vperm.slane %v1119, 1
    %v1171 = vperm.slane %v1139, 1
    %v1172 = vperm.slane %v1159, 1
    %v1173 = vadd.f32 %v1165, %v1169
    %v1174 = vadd.f32 %v1166, %v1170
    %v1175 = vadd.f32 %v1167, %v1171
    %v1176 = vadd.f32 %v1168, %v1172
    %v1177 = vmax.f32 %v1173, 0.0
    %v1178 = vmax.f32 %v1174, 0.0
    %v1179 = vmax.f32 %v1175, 0.0
    %v1180 = vmax.f32 %v1176, 0.0
    %v1181 = vpack.c.bf16 %v1177, %v1177
    %v1182 = vpack.c.bf16 %v1178, %v1178
    %v1183 = vpack.c.bf16 %v1179, %v1179
    %v1184 = vpack.c.bf16 %v1180, %v1180
    %v1185 = vld [vmem:[#allocation2] sm:$0xff]
    %v1186 = vld [vmem:[#allocation2 + $0x8] sm:$0xff]
    %v1187 = vld [vmem:[#allocation2 + $0x10] sm:$0xff]
    %v1188 = vld [vmem:[#allocation2 + $0x18] sm:$0xff]
    %v1189 = vld [vmem:[#allocation2 + $0x20] sm:$0xff]
    %v1190 = vld [vmem:[#allocation2 + $0x28] sm:$0xff]
    %v1191 = vld [vmem:[#allocation2 + $0x30] sm:$0xff]
    %v1192 = vld [vmem:[#allocation2 + $0x38] sm:$0xff]
    %v1193 = vld [vmem:[#allocation2 + $0x40] sm:$0xff]
    %v1194 = vld [vmem:[#allocation2 + $0x48] sm:$0xff]
    %v1195 = vld [vmem:[#allocation2 + $0x50] sm:$0xff]
    %v1196 = vld [vmem:[#allocation2 + $0x58] sm:$0xff]
    %v1197 = vld [vmem:[#allocation2 + $0x60] sm:$0xff]
    %v1198 = vld [vmem:[#allocation2 + $0x68] sm:$0xff]
    %v1199 = vld [vmem:[#allocation2 + $0x70] sm:$0xff]
    %v1200 = vld [vmem:[#allocation2 + $0x78] sm:$0xff]
    %v1201 = vld [vmem:[#allocation2 + $0x80] sm:$0xff]
    %v1202 = vld [vmem:[#allocation2 + $0x88] sm:$0xff]
    %v1203 = vld [vmem:[#allocation2 + $0x90] sm:$0xff]
    %v1204 = vld [vmem:[#allocation2 + $0x98] sm:$0xff]
    %v1205 = vld [vmem:[#allocation2 + $0xa0] sm:$0xff]
    %v1206 = vld [vmem:[#allocation2 + $0xa8] sm:$0xff]
    %v1207 = vld [vmem:[#allocation2 + $0xb0] sm:$0xff]
    %v1208 = vld [vmem:[#allocation2 + $0xb8] sm:$0xff]
    %v1209 = vld [vmem:[#allocation2 + $0xc0] sm:$0xff]
    %v1210 = vld [vmem:[#allocation2 + $0xc8] sm:$0xff]
    %v1211 = vld [vmem:[#allocation2 + $0xd0] sm:$0xff]
    %v1212 = vld [vmem:[#allocation2 + $0xd8] sm:$0xff]
    %v1213 = vld [vmem:[#allocation2 + $0xe0] sm:$0xff]
    %v1214 = vld [vmem:[#allocation2 + $0xe8] sm:$0xff]
    %v1215 = vld [vmem:[#allocation2 + $0xf0] sm:$0xff]
    %v1216 = vld [vmem:[#allocation2 + $0xf8] sm:$0xff]
    %v1217 = vld [vmem:[#allocation2 + $0x100] sm:$0xff]
    %v1218 = vld [vmem:[#allocation2 + $0x108] sm:$0xff]
    %v1219 = vld [vmem:[#allocation2 + $0x110] sm:$0xff]
    %v1220 = vld [vmem:[#allocation2 + $0x118] sm:$0xff]
    %v1221 = vld [vmem:[#allocation2 + $0x120] sm:$0xff]
    %v1222 = vld [vmem:[#allocation2 + $0x128] sm:$0xff]
    %v1223 = vld [vmem:[#allocation2 + $0x130] sm:$0xff]
    %v1224 = vld [vmem:[#allocation2 + $0x138] sm:$0xff]
    %v1225 = vld [vmem:[#allocation2 + $0x140] sm:$0xff]
    %v1226 = vld [vmem:[#allocation2 + $0x148] sm:$0xff]
    %v1227 = vld [vmem:[#allocation2 + $0x150] sm:$0xff]
    %v1228 = vld [vmem:[#allocation2 + $0x158] sm:$0xff]
    %v1229 = vld [vmem:[#allocation2 + $0x160] sm:$0xff]
    %v1230 = vld [vmem:[#allocation2 + $0x168] sm:$0xff]
    %v1231 = vld [vmem:[#allocation2 + $0x170] sm:$0xff]
    %v1232 = vld [vmem:[#allocation2 + $0x178] sm:$0xff]
    %v1233 = vld [vmem:[#allocation2 + $0x180] sm:$0xff]
    %v1234 = vld [vmem:[#allocation2 + $0x188] sm:$0xff]
    %v1235 = vld [vmem:[#allocation2 + $0x190] sm:$0xff]
    %v1236 = vld [vmem:[#allocation2 + $0x198] sm:$0xff]
    %v1237 = vld [vmem:[#allocation2 + $0x1a0] sm:$0xff]
    %v1238 = vld [vmem:[#allocation2 + $0x1a8] sm:$0xff]
    %v1239 = vld [vmem:[#allocation2 + $0x1b0] sm:$0xff]
    %v1240 = vld [vmem:[#allocation2 + $0x1b8] sm:$0xff]
    %v1241 = vld [vmem:[#allocation2 + $0x1c0] sm:$0xff]
    %v1242 = vld [vmem:[#allocation2 + $0x1c8] sm:$0xff]
    %v1243 = vld [vmem:[#allocation2 + $0x1d0] sm:$0xff]
    %v1244 = vld [vmem:[#allocation2 + $0x1d8] sm:$0xff]
    %v1245 = vld [vmem:[#allocation2 + $0x1e0] sm:$0xff]
    %v1246 = vld [vmem:[#allocation2 + $0x1e8] sm:$0xff]
    %v1247 = vld [vmem:[#allocation2 + $0x1f0] sm:$0xff]
    %v1248 = vld [vmem:[#allocation2 + $0x1f8] sm:$0xff]
    %v1313 = vunpack.c.l.b16 %v1185
    %v1314 = vunpack.c.h.b16 %v1185
    %v1315 = vunpack.c.l.b16 %v1186
    %v1316 = vunpack.c.h.b16 %v1186
    %v1317 = vunpack.c.l.b16 %v1187
    %v1318 = vunpack.c.h.b16 %v1187
    %v1319 = vunpack.c.l.b16 %v1188
    %v1320 = vunpack.c.h.b16 %v1188
    %v1321 = vunpack.c.l.b16 %v1189
    %v1322 = vunpack.c.h.b16 %v1189
    %v1323 = vunpack.c.l.b16 %v1190
    %v1324 = vunpack.c.h.b16 %v1190
    %v1325 = vunpack.c.l.b16 %v1191
    %v1326 = vunpack.c.h.b16 %v1191
    %v1327 = vunpack.c.l.b16 %v1192
    %v1328 = vunpack.c.h.b16 %v1192
    %v1329 = vunpack.c.l.b16 %v1193
    %v1330 = vunpack.c.h.b16 %v1193
    %v1331 = vunpack.c.l.b16 %v1194
    %v1332 = vunpack.c.h.b16 %v1194
    %v1333 = vunpack.c.l.b16 %v1195
    %v1334 = vunpack.c.h.b16 %v1195
    %v1335 = vunpack.c.l.b16 %v1196
    %v1336 = vunpack.c.h.b16 %v1196
    %v1337 = vunpack.c.l.b16 %v1197
    %v1338 = vunpack.c.h.b16 %v1197
    %v1339 = vunpack.c.l.b16 %v1198
    %v1340 = vunpack.c.h.b16 %v1198
    %v1341 = vunpack.c.l.b16 %v1199
    %v1342 = vunpack.c.h.b16 %v1199
    %v1343 = vunpack.c.l.b16 %v1200
    %v1344 = vunpack.c.h.b16 %v1200
    %v1345 = vunpack.c.l.b16 %v1201
    %v1346 = vunpack.c.h.b16 %v1201
    %v1347 = vunpack.c.l.b16 %v1202
    %v1348 = vunpack.c.h.b16 %v1202
    %v1349 = vunpack.c.l.b16 %v1203
    %v1350 = vunpack.c.h.b16 %v1203
    %v1351 = vunpack.c.l.b16 %v1204
    %v1352 = vunpack.c.h.b16 %v1204
    %v1353 = vunpack.c.l.b16 %v1205
    %v1354 = vunpack.c.h.b16 %v1205
    %v1355 = vunpack.c.l.b16 %v1206
    %v1356 = vunpack.c.h.b16 %v1206
    %v1357 = vunpack.c.l.b16 %v1207
    %v1358 = vunpack.c.h.b16 %v1207
    %v1359 = vunpack.c.l.b16 %v1208
    %v1360 = vunpack.c.h.b16 %v1208
    %v1361 = vunpack.c.l.b16 %v1209
    %v1362 = vunpack.c.h.b16 %v1209
    %v1363 = vunpack.c.l.b16 %v1210
    %v1364 = vunpack.c.h.b16 %v1210
    %v1365 = vunpack.c.l.b16 %v1211
    %v1366 = vunpack.c.h.b16 %v1211
    %v1367 = vunpack.c.l.b16 %v1212
    %v1368 = vunpack.c.h.b16 %v1212
    %v1369 = vunpack.c.l.b16 %v1213
    %v1370 = vunpack.c.h.b16 %v1213
    %v1371 = vunpack.c.l.b16 %v1214
    %v1372 = vunpack.c.h.b16 %v1214
    %v1373 = vunpack.c.l.b16 %v1215
    %v1374 = vunpack.c.h.b16 %v1215
    %v1375 = vunpack.c.l.b16 %v1216
    %v1376 = vunpack.c.h.b16 %v1216
    %v1377 = vunpack.c.l.b16 %v1217
    %v1378 = vunpack.c.h.b16 %v1217
    %v1379 = vunpack.c.l.b16 %v1218
    %v1380 = vunpack.c.h.b16 %v1218
    %v1381 = vunpack.c.l.b16 %v1219
    %v1382 = vunpack.c.h.b16 %v1219
    %v1383 = vunpack.c.l.b16 %v1220
    %v1384 = vunpack.c.h.b16 %v1220
    %v1385 = vunpack.c.l.b16 %v1221
    %v1386 = vunpack.c.h.b16 %v1221
    %v1387 = vunpack.c.l.b16 %v1222
    %v1388 = vunpack.c.h.b16 %v1222
    %v1389 = vunpack.c.l.b16 %v1223
    %v1390 = vunpack.c.h.b16 %v1223
    %v1391 = vunpack.c.l.b16 %v1224
    %v1392 = vunpack.c.h.b16 %v1224
    %v1393 = vunpack.c.l.b16 %v1225
    %v1394 = vunpack.c.h.b16 %v1225
    %v1395 = vunpack.c.l.b16 %v1226
    %v1396 = vunpack.c.h.b16 %v1226
    %v1397 = vunpack.c.l.b16 %v1227
    %v1398 = vunpack.c.h.b16 %v1227
    %v1399 = vunpack.c.l.b16 %v1228
    %v1400 = vunpack.c.h.b16 %v1228
    %v1401 = vunpack.c.l.b16 %v1229
    %v1402 = vunpack.c.h.b16 %v1229
    %v1403 = vunpack.c.l.b16 %v1230
    %v1404 = vunpack.c.h.b16 %v1230
    %v1405 = vunpack.c.l.b16 %v1231
    %v1406 = vunpack.c.h.b16 %v1231
    %v1407 = vunpack.c.l.b16 %v1232
    %v1408 = vunpack.c.h.b16 %v1232
    %v1409 = vunpack.c.l.b16 %v1233
    %v1410 = vunpack.c.h.b16 %v1233
    %v1411 = vunpack.c.l.b16 %v1234
    %v1412 = vunpack.c.h.b16 %v1234
    %v1413 = vunpack.c.l.b16 %v1235
    %v1414 = vunpack.c.h.b16 %v1235
    %v1415 = vunpack.c.l.b16 %v1236
    %v1416 = vunpack.c.h.b16 %v1236
    %v1417 = vunpack.c.l.b16 %v1237
    %v1418 = vunpack.c.h.b16 %v1237
    %v1419 = vunpack.c.l.b16 %v1238
    %v1420 = vunpack.c.h.b16 %v1238
    %v1421 = vunpack.c.l.b16 %v1239
    %v1422 = vunpack.c.h.b16 %v1239
    %v1423 = vunpack.c.l.b16 %v1240
    %v1424 = vunpack.c.h.b16 %v1240
    %v1425 = vunpack.c.l.b16 %v1241
    %v1426 = vunpack.c.h.b16 %v1241
    %v1427 = vunpack.c.l.b16 %v1242
    %v1428 = vunpack.c.h.b16 %v1242
    %v1429 = vunpack.c.l.b16 %v1243
    %v1430 = vunpack.c.h.b16 %v1243
    %v1431 = vunpack.c.l.b16 %v1244
    %v1432 = vunpack.c.h.b16 %v1244
    %v1433 = vunpack.c.l.b16 %v1245
    %v1434 = vunpack.c.h.b16 %v1245
    %v1435 = vunpack.c.l.b16 %v1246
    %v1436 = vunpack.c.h.b16 %v1246
    %v1437 = vunpack.c.l.b16 %v1247
    %v1438 = vunpack.c.h.b16 %v1247
    %v1439 = vunpack.c.l.b16 %v1248
    %v1440 = vunpack.c.h.b16 %v1248
    %v1441 = vpack.c.b16 %v1315, %v1313
    %v1442 = vpack.c.b16 %v1316, %v1314
    %v1443 = vpack.c.b16 %v1319, %v1317
    %v1444 = vpack.c.b16 %v1320, %v1318
    %v1445 = vpack.c.b16 %v1323, %v1321
    %v1446 = vpack.c.b16 %v1324, %v1322
    %v1447 = vpack.c.b16 %v1327, %v1325
    %v1448 = vpack.c.b16 %v1328, %v1326
    %v1449 = vpack.c.b16 %v1331, %v1329
    %v1450 = vpack.c.b16 %v1332, %v1330
    %v1451 = vpack.c.b16 %v1335, %v1333
    %v1452 = vpack.c.b16 %v1336, %v1334
    %v1453 = vpack.c.b16 %v1339, %v1337
    %v1454 = vpack.c.b16 %v1340, %v1338
    %v1455 = vpack.c.b16 %v1343, %v1341
    %v1456 = vpack.c.b16 %v1344, %v1342
    %v1457 = vpack.c.b16 %v1347, %v1345
    %v1458 = vpack.c.b16 %v1348, %v1346
    %v1459 = vpack.c.b16 %v1351, %v1349
    %v1460 = vpack.c.b16 %v1352, %v1350
    %v1461 = vpack.c.b16 %v1355, %v1353
    %v1462 = vpack.c.b16 %v1356, %v1354
    %v1463 = vpack.c.b16 %v1359, %v1357
    %v1464 = vpack.c.b16 %v1360, %v1358
    %v1465 = vpack.c.b16 %v1363, %v1361
    %v1466 = vpack.c.b16 %v1364, %v1362
    %v1467 = vpack.c.b16 %v1367, %v1365
    %v1468 = vpack.c.b16 %v1368, %v1366
    %v1469 = vpack.c.b16 %v1371, %v1369
    %v1470 = vpack.c.b16 %v1372, %v1370
    %v1471 = vpack.c.b16 %v1375, %v1373
    %v1472 = vpack.c.b16 %v1376, %v1374
    %v1473 = vpack.c.b16 %v1379, %v1377
    %v1474 = vpack.c.b16 %v1380, %v1378
    %v1475 = vpack.c.b16 %v1383, %v1381
    %v1476 = vpack.c.b16 %v1384, %v1382
    %v1477 = vpack.c.b16 %v1387, %v1385
    %v1478 = vpack.c.b16 %v1388, %v1386
    %v1479 = vpack.c.b16 %v1391, %v1389
    %v1480 = vpack.c.b16 %v1392, %v1390
    %v1481 = vpack.c.b16 %v1395, %v1393
    %v1482 = vpack.c.b16 %v1396, %v1394
    %v1483 = vpack.c.b16 %v1399, %v1397
    %v1484 = vpack.c.b16 %v1400, %v1398
    %v1485 = vpack.c.b16 %v1403, %v1401
    %v1486 = vpack.c.b16 %v1404, %v1402
    %v1487 = vpack.c.b16 %v1407, %v1405
    %v1488 = vpack.c.b16 %v1408, %v1406
    %v1489 = vpack.c.b16 %v1411, %v1409
    %v1490 = vpack.c.b16 %v1412, %v1410
    %v1491 = vpack.c.b16 %v1415, %v1413
    %v1492 = vpack.c.b16 %v1416, %v1414
    %v1493 = vpack.c.b16 %v1419, %v1417
    %v1494 = vpack.c.b16 %v1420, %v1418
    %v1495 = vpack.c.b16 %v1423, %v1421
    %v1496 = vpack.c.b16 %v1424, %v1422
    %v1497 = vpack.c.b16 %v1427, %v1425
    %v1498 = vpack.c.b16 %v1428, %v1426
    %v1499 = vpack.c.b16 %v1431, %v1429
    %v1500 = vpack.c.b16 %v1432, %v1430
    %v1501 = vpack.c.b16 %v1435, %v1433
    %v1502 = vpack.c.b16 %v1436, %v1434
    %v1503 = vpack.c.b16 %v1439, %v1437
    %v1504 = vpack.c.b16 %v1440, %v1438
    %1569 = vmatpush.bf16.msra.mxu0 %v1455
    %1570 = vmatpush.bf16.msra.mxu0 %v1453
    %1571 = vmatpush.bf16.msra.mxu0 %v1451
    %1572 = vmatpush.bf16.msra.mxu0 %v1449
    %1573 = vmatpush.bf16.msra.mxu0 %v1447
    %1574 = vmatpush.bf16.msra.mxu0 %v1445
    %1575 = vmatpush.bf16.msra.mxu0 %v1443
    %1576 = vmatpush.bf16.msra.mxu0 %v1441
    %1577 = vmatmul.bf16.gmra.mxu0 %v1181
    %v1578 = vpop.f32.mrf.mxu0
    %v1579 = vadd.f32 0.0, %v1578
    %v1580 = vpop.f32.mrf.mxu0
    %1581 = vdwg.mxu0
    %1582 = vmatpush.bf16.msra.mxu0 %v1471
    %1583 = vmatpush.bf16.msra.mxu0 %v1469
    %1584 = vmatpush.bf16.msra.mxu0 %v1467
    %1585 = vmatpush.bf16.msra.mxu0 %v1465
    %1586 = vmatpush.bf16.msra.mxu0 %v1463
    %1587 = vmatpush.bf16.msra.mxu0 %v1461
    %1588 = vmatpush.bf16.msra.mxu0 %v1459
    %1589 = vmatpush.bf16.msra.mxu0 %v1457
    %1590 = vmatmul.bf16.gmra.mxu0 %v1182
    %v1591 = vpop.f32.mrf.mxu0
    %v1592 = vadd.f32 %v1579, %v1591
    %v1593 = vpop.f32.mrf.mxu0
    %1594 = vdwg.mxu0
    %1595 = vmatpush.bf16.msra.mxu0 %v1487
    %1596 = vmatpush.bf16.msra.mxu0 %v1485
    %1597 = vmatpush.bf16.msra.mxu0 %v1483
    %1598 = vmatpush.bf16.msra.mxu0 %v1481
    %1599 = vmatpush.bf16.msra.mxu0 %v1479
    %1600 = vmatpush.bf16.msra.mxu0 %v1477
    %1601 = vmatpush.bf16.msra.mxu0 %v1475
    %1602 = vmatpush.bf16.msra.mxu0 %v1473
    %1603 = vmatmul.bf16.gmra.mxu0 %v1183
    %v1604 = vpop.f32.mrf.mxu0
    %v1605 = vadd.f32 %v1592, %v1604
    %v1606 = vpop.f32.mrf.mxu0
    %1607 = vdwg.mxu0
    %1608 = vmatpush.bf16.msra.mxu0 %v1503
    %1609 = vmatpush.bf16.msra.mxu0 %v1501
    %1610 = vmatpush.bf16.msra.mxu0 %v1499
    %1611 = vmatpush.bf16.msra.mxu0 %v1497
    %1612 = vmatpush.bf16.msra.mxu0 %v1495
    %1613 = vmatpush.bf16.msra.mxu0 %v1493
    %1614 = vmatpush.bf16.msra.mxu0 %v1491
    %1615 = vmatpush.bf16.msra.mxu0 %v1489
    %1616 = vmatmul.bf16.gmra.mxu0 %v1184
    %v1617 = vpop.f32.mrf.mxu0
    %v1618 = vadd.f32 %v1605, %v1617
    %v1619 = vpop.f32.mrf.mxu0
    %1620 = vdwg.mxu0
    %1621 = vmatpush.bf16.msra.mxu0 %v1456
    %1622 = vmatpush.bf16.msra.mxu0 %v1454
    %1623 = vmatpush.bf16.msra.mxu0 %v1452
    %1624 = vmatpush.bf16.msra.mxu0 %v1450
    %1625 = vmatpush.bf16.msra.mxu0 %v1448
    %1626 = vmatpush.bf16.msra.mxu0 %v1446
    %1627 = vmatpush.bf16.msra.mxu0 %v1444
    %1628 = vmatpush.bf16.msra.mxu0 %v1442
    %1629 = vmatmul.bf16.gmra.mxu0 %v1181
    %v1630 = vpop.f32.mrf.mxu0
    %v1631 = vadd.f32 0.0, %v1630
    %v1632 = vpop.f32.mrf.mxu0
    %1633 = vdwg.mxu0
    %1634 = vmatpush.bf16.msra.mxu0 %v1472
    %1635 = vmatpush.bf16.msra.mxu0 %v1470
    %1636 = vmatpush.bf16.msra.mxu0 %v1468
    %1637 = vmatpush.bf16.msra.mxu0 %v1466
    %1638 = vmatpush.bf16.msra.mxu0 %v1464
    %1639 = vmatpush.bf16.msra.mxu0 %v1462
    %1640 = vmatpush.bf16.msra.mxu0 %v1460
    %1641 = vmatpush.bf16.msra.mxu0 %v1458
    %1642 = vmatmul.bf16.gmra.mxu0 %v1182
    %v1643 = vpop.f32.mrf.mxu0
    %v1644 = vadd.f32 %v1631, %v1643
    %v1645 = vpop.f32.mrf.mxu0
    %1646 = vdwg.mxu0
    %1647 = vmatpush.bf16.msra.mxu0 %v1488
    %1648 = vmatpush.bf16.msra.mxu0 %v1486
    %1649 = vmatpush.bf16.msra.mxu0 %v1484
    %1650 = vmatpush.bf16.msra.mxu0 %v1482
    %1651 = vmatpush.bf16.msra.mxu0 %v1480
    %1652 = vmatpush.bf16.msra.mxu0 %v1478
    %1653 = vmatpush.bf16.msra.mxu0 %v1476
    %1654 = vmatpush.bf16.msra.mxu0 %v1474
    %1655 = vmatmul.bf16.gmra.mxu0 %v1183
    %v1656 = vpop.f32.mrf.mxu0
    %v1657 = vadd.f32 %v1644, %v1656
    %v1658 = vpop.f32.mrf.mxu0
    %1659 = vdwg.mxu0
    %1660 = vmatpush.bf16.msra.mxu0 %v1504
    %1661 = vmatpush.bf16.msra.mxu0 %v1502
    %1662 = vmatpush.bf16.msra.mxu0 %v1500
    %1663 = vmatpush.bf16.msra.mxu0 %v1498
    %1664 = vmatpush.bf16.msra.mxu0 %v1496
    %1665 = vmatpush.bf16.msra.mxu0 %v1494
    %1666 = vmatpush.bf16.msra.mxu0 %v1492
    %1667 = vmatpush.bf16.msra.mxu0 %v1490
    %1668 = vmatmul.bf16.gmra.mxu0 %v1184
    %v1669 = vpop.f32.mrf.mxu0
    %v1670 = vadd.f32 %v1657, %v1669
    %v1671 = vpop.f32.mrf.mxu0
    %1672 = vdwg.mxu0
    %v1673 = vtanh.pop %v1618
    %v1674 = vtanh.pop %v1670
    %v1675 = vadd.f32 %v1673, 1.0
    %v1676 = vadd.f32 %v1674, 1.0
    %v1677 = vmul.f32 %v1675, 0.5
    %v1678 = vmul.f32 %v1676, 0.5
    %v1681 = vrot.slane %v1678, 6
    %v1682 = vsel %vm159, %v1677, %v1681
    %1684 = vst [vmem:[#allocation5] sm:$0xf] %v1682
    // Predicated region
    $region50: #{tpu_custom_call.1} parent=1 // pred_check
      _
    $region51: #{tpu_custom_call.1} parent=1 // pred_check_branch
      %1686 = sbr.rel (0) target = $region53
    $region52: #{tpu_custom_call.1} parent=1 // pred_region
      %1688 = vsyncadd [#allocation4], 0
      %s1690 = sshll.u32 [#allocation5], 4
      %s1691 = int_to_ptr.vmem [resolvable:$true] %s1690
      %s1692 = sshll.u32 %s11, 4
      %s1693 = int_to_ptr.hbm [resolvable:$true] %s1692
      %1695 = dma.vmem_to_hbm [thread:$0]  %s1691, 64, %s1693, [#allocation4]
    $region53: #{tpu_custom_call.1} parent=1 // pred_fallthru
      _
    // Predicated region
    $region54: #{tpu_custom_call.1} parent=1 // pred_check
      _
    $region55: #{tpu_custom_call.1} parent=1 // pred_check_branch
      %1697 = sbr.rel (0) target = $region57
    $region56: #{tpu_custom_call.1} parent=1 // pred_region
      %1699 = dma.done [#allocation4], 64
    $region57: #{tpu_custom_call.1} parent=1 // pred_fallthru
      _
    %1700 = vsyncpa [#allocation3], 1
    %1701 = vsyncpa [#allocation4], 1

</llo_original>
